<compile_context>
chip_gen: v5e
topology: v5e:2x2
jax: 0.10.0
libtpu: 0.0.40
codegen_flags: <defaults>
</compile_context>

<pallas_src>
import math
from functools import partial

import jax
import jax.numpy as jnp
from jax import lax
from jax.experimental import pallas as pl
from jax.experimental.pallas import tpu as pltpu


def _round_up(x, m):
    return ((x + m - 1) // m) * m


def _pick_batch_block(B):
    """Prefer >=2 'parallel' grid steps (v7x has 2 TensorCores) when the batch
    allows a sublane-aligned split that divides B; otherwise one step."""
    half = _round_up(max(B // 2, 1), 8)
    if half < B and B % half == 0:
        return half
    return B


# ----------------------------------------------------------------------------
# Fused kernel: masked GRU (fused gates) + attention + output proj + log_softmax
# ----------------------------------------------------------------------------
def fused_decoder_kernel(
    # inputs
    xlen_ref, ylen_ref, embed_ref, h0_ref,
    wih_ref, bih_ref, whh_ref, bhh_ref,
    ctx_ref, win_ref, wout_c_ref, wout_o_ref, bout_ref,
    wv_ref, bv_ref,
    # outputs
    logp_ref, hT_ref,
    # scratch
    gi_scr, out_scr,
):
    T, bb, E = embed_ref.shape                     # embeddings arrive time-major
    Hp = h0_ref.shape[-1]                          # H padded to a 128 multiple
    S, E2 = ctx_ref.shape[1], ctx_ref.shape[2]
    H3 = wih_ref.shape[-1]                         # 3 * Hp (lane-aligned gate blocks)
    Vp = wv_ref.shape[-1]
    f32 = jnp.float32
    cdt = wih_ref.dtype                            # MXU operand dtype (f32 or bf16)

    # ---- hoisted fused input projection: ONE matmul for all gates & timesteps.
    x2d = embed_ref[...].reshape(T * bb, E)
    gi_scr[...] = (jnp.dot(x2d, wih_ref[...], preferred_element_type=f32)
                   + bih_ref[...]).reshape(T, bb, H3)

    whh = whh_ref[...]                             # loop-invariant, hoisted
    bhh = bhh_ref[...]
    ylen = ylen_ref[...]                           # (bb, 1) int32

    # ---- sequential recurrence: h stays in vregs; ONE fused (Hp, 3Hp) hidden
    #      matmul per step on the serialized critical path.
    # TODO(synk): at production T (>~32) switch to lax.fori_loop with a small
    # unroll factor (2-4) to bound vreg live ranges; T is tiny here.
    h = h0_ref[...]                                # (bb, Hp) f32, pad columns are 0
    for t in range(T):
        gi = gi_scr[t]                             # (bb, 3Hp) f32
        gh = jnp.dot(h.astype(cdt), whh, preferred_element_type=f32) + bhh
        r = jax.nn.sigmoid(gi[:, 0:Hp] + gh[:, 0:Hp])
        z = jax.nn.sigmoid(gi[:, Hp:2 * Hp] + gh[:, Hp:2 * Hp])
        n = jnp.tanh(gi[:, 2 * Hp:3 * Hp] + r * gh[:, 2 * Hp:3 * Hp])
        h_new = (1.0 - z) * n + z * h
        valid = t < ylen                           # (bb, 1) bool
        # pad_packed_sequence zero-pads past each length; state freezes there.
        out_scr[:, t:t + 1, :] = jnp.where(valid, h_new, 0.0)[:, None, :]
        h = jnp.where(valid, h_new, h)
    hT_ref[...] = h                                # final hidden, written once

    # ---- attention (batch-major throughout; no transpose of GRU outputs) -----
    out = out_scr[...]                             # (bb, T, Hp) f32
    ctx = ctx_ref[...]                             # (bb, S, E2) cdt

    # linear_in (no bias)
    ctx_in = jnp.dot(ctx.reshape(bb * S, E2), win_ref[...],
                     preferred_element_type=f32).reshape(bb, S, Hp)
    scores = jnp.einsum("bth,bsh->bts", out.astype(cdt), ctx_in.astype(cdt),
                        preferred_element_type=f32)            # (bb, T, S)

    # mask built in-kernel from lengths (fill value -1e-06 as in the module)
    t_idx = lax.broadcasted_iota(jnp.int32, (bb, T, S), 1)
    s_idx = lax.broadcasted_iota(jnp.int32, (bb, T, S), 2)
    keep = (t_idx < ylen[:, :, None]) & (s_idx < xlen_ref[...][:, :, None])
    scores = jnp.where(keep, scores, jnp.float32(-1e-6))

    # softmax over S (exact divide: one VPU div hidden under MXU slack)
    smax = jnp.max(scores, axis=-1, keepdims=True)
    e = jnp.exp(scores - smax)
    p = e / jnp.sum(e, axis=-1, keepdims=True)

    cvec = jnp.einsum("bts,bse->bte", p.astype(cdt), ctx,
                      preferred_element_type=f32)              # (bb, T, E2)

    # linear_out split into two matmuls (no concat copy), then tanh
    h_att = jnp.tanh(
        jnp.dot(cvec.reshape(bb * T, E2).astype(cdt), wout_c_ref[...],
                preferred_element_type=f32)
        + jnp.dot(out.reshape(bb * T, Hp).astype(cdt), wout_o_ref[...],
                  preferred_element_type=f32)
        + bout_ref[...])                                       # (bb*T, Hp) f32

    # vocab projection (V padded to lane-dense Vp; pad bias = -1e30 so the pad
    # columns vanish from the logsumexp), then log_softmax in f32.
    # TODO(synk): at production V (~32-50k) tile this matmul over Vp (two-pass /
    # lse-side-output logsumexp) so logits + wv fit v7x's 64 MiB VMEM.
    logits = jnp.dot(h_att.astype(cdt), wv_ref[...],
                     preferred_element_type=f32) + bv_ref[...]  # (bb*T, Vp)
    lmax = jnp.max(logits, axis=-1, keepdims=True)
    lse = jnp.log(jnp.sum(jnp.exp(logits - lmax), axis=-1, keepdims=True)) + lmax
    logp_ref[...] = (logits - lse).reshape(bb, T, Vp)


def run_fused_decoder(xlen, ylen, embed_tm, h0, prep, enc, batch_block=None):
    T, B, E = embed_tm.shape
    Hp = h0.shape[-1]
    H3 = prep["wih"].shape[-1]
    S, E2 = enc.shape[1], enc.shape[2]
    Vp = prep["wv"].shape[-1]
    bb = _pick_batch_block(B) if batch_block is None else batch_block
    assert B % bb == 0, "batch_block must divide the batch size"
    grid = (B // bb,)

    c = lambda i: (0, 0)
    operands = (xlen, ylen, embed_tm, h0,
                prep["wih"], prep["bih"], prep["whh"], prep["bhh"],
                enc, prep["win"], prep["wout_c"], prep["wout_o"], prep["bout"],
                prep["wv"], prep["bv"])

    in_specs = [
        pl.BlockSpec((bb, 1), lambda i: (i, 0)),                 # x lengths
        pl.BlockSpec((bb, 1), lambda i: (i, 0)),                 # y lengths
        pl.BlockSpec((T, bb, E), lambda i: (0, i, 0)),           # embeddings (time-major)
        pl.BlockSpec((bb, Hp), lambda i: (i, 0)),                # h0 (padded to Hp)
        # Weights / biases: constant index map -> resident across the grid.
        # NOTE: these could additionally use pipeline_mode=pl.Buffered(1) to drop
        # the second pipeline buffer; default buffering kept for portability.
        pl.BlockSpec((E, H3), c), pl.BlockSpec((1, H3), c),      # fused W_ih, b_ih
        pl.BlockSpec((Hp, H3), c), pl.BlockSpec((1, H3), c),     # fused W_hh, b_hh
        pl.BlockSpec((bb, S, E2), lambda i: (i, 0, 0)),          # encoder context
        pl.BlockSpec((E2, Hp), c),                               # linear_in
        pl.BlockSpec((E2, Hp), c), pl.BlockSpec((Hp, Hp), c),    # linear_out (split)
        pl.BlockSpec((1, Hp), c),                                # linear_out bias
        pl.BlockSpec((Hp, Vp), c), pl.BlockSpec((1, Vp), c),     # vocab proj (lane-padded)
    ]
    out_specs = [
        pl.BlockSpec((bb, T, Vp), lambda i: (i, 0, 0)),          # log-probs (lane-dense)
        pl.BlockSpec((bb, Hp), lambda i: (i, 0)),                # final hidden
    ]
    scratch_shapes = [
        pltpu.VMEM((T, bb, H3), jnp.float32),                    # hoisted gate inputs
        pltpu.VMEM((bb, T, Hp), jnp.float32),                    # per-step GRU outputs
    ]

    # VMEM budget: ~2x (double-buffered) operand+result blocks + scratch, with
    # margin; clamped to a range safe on v5e/v6e (128 MiB) and v7x (64 MiB).
    est = sum(math.prod(a.shape) * a.dtype.itemsize for a in operands)
    est += (bb * T * Vp + bb * Hp) * 4                           # outputs
    est = 2 * est + (T * bb * H3 + bb * T * Hp) * 4              # buffers + scratch
    vmem_limit = int(min(48 << 20, max(32 << 20, 2 * est)))

    return pl.pallas_call(
        fused_decoder_kernel,
        out_shape=(jax.ShapeDtypeStruct((B, T, Vp), jnp.float32),
                   jax.ShapeDtypeStruct((B, Hp), jnp.float32)),
        grid_spec=pltpu.PrefetchScalarGridSpec(
            num_scalar_prefetch=0,
            grid=grid,
            in_specs=in_specs,
            out_specs=out_specs,
            scratch_shapes=scratch_shapes),
        compiler_params=pltpu.CompilerParams(
            dimension_semantics=("parallel",),                   # batch axis -> megacore
            vmem_limit_bytes=vmem_limit),
    )(*operands)


# ----------------------------------------------------------------------------
# Parameters (PyTorch-layout) and kernel-side preparation (fuse / pad / cast)
# ----------------------------------------------------------------------------
def init_params(key, vocab_size, embed_size, enc_hidden, dec_hidden):
    H = dec_hidden
    E2 = 2 * enc_hidden
    ks = jax.random.split(key, 10)
    u = lambda k, shape, fan: jax.random.uniform(
        k, shape, jnp.float32, -1.0 / jnp.sqrt(fan), 1.0 / jnp.sqrt(fan))
    return dict(
        embedding=jax.random.normal(ks[0], (vocab_size, embed_size), jnp.float32),
        gru_w_ih=u(ks[1], (3 * H, embed_size), H),     # gate order (r, z, n), PyTorch layout
        gru_w_hh=u(ks[2], (3 * H, H), H),
        gru_b_ih=u(ks[3], (3 * H,), H),
        gru_b_hh=u(ks[4], (3 * H,), H),
        attn_w_in=u(ks[5], (H, E2), E2),               # linear_in (no bias)
        attn_w_out=u(ks[6], (H, E2 + H), E2 + H),      # linear_out on cat([context, out])
        attn_b_out=u(ks[7], (H,), E2 + H),
        lin_w=u(ks[8], (vocab_size, H), H),
        lin_b=u(ks[9], (vocab_size,), H),
    )


def prepare_decoder_params(params, matmul_dtype=jnp.float32):
    """Fuse GRU gates, pad H->Hp / V->Vp (128-lane), transpose to (in, out), and
    cast the MXU operands to `matmul_dtype`.  Biases stay f32.  Call once,
    outside the per-step forward."""
    H = params["gru_w_hh"].shape[1]
    E2 = params["attn_w_in"].shape[1]
    V = params["lin_w"].shape[0]
    Hp = _round_up(H, 128)
    Vp = _round_up(V, 128)
    cdt = matmul_dtype

    gate_pad = lambda m: jnp.pad(m, ((0, 0), (0, Hp - H)))          # (in, H) -> (in, Hp)
    gate_pad_b = lambda b: jnp.pad(b, (0, Hp - H))[None, :]         # (H,)   -> (1, Hp)

    w_ih, w_hh = params["gru_w_ih"], params["gru_w_hh"]
    wih_f = jnp.concatenate([gate_pad(w_ih[g * H:(g + 1) * H].T) for g in range(3)], axis=1)
    whh_f = jnp.pad(
        jnp.concatenate([gate_pad(w_hh[g * H:(g + 1) * H].T) for g in range(3)], axis=1),
        ((0, Hp - H), (0, 0)))
    bih_f = jnp.concatenate(
        [gate_pad_b(params["gru_b_ih"][g * H:(g + 1) * H]) for g in range(3)], axis=1)
    bhh_f = jnp.concatenate(
        [gate_pad_b(params["gru_b_hh"][g * H:(g + 1) * H]) for g in range(3)], axis=1)

    w_out = params["attn_w_out"]
    win_p = jnp.pad(params["attn_w_in"].T, ((0, 0), (0, Hp - H)))            # (E2, Hp)
    wout_c_p = jnp.pad(w_out[:, :E2].T, ((0, 0), (0, Hp - H)))               # (E2, Hp)
    wout_o_p = jnp.pad(w_out[:, E2:].T, ((0, Hp - H), (0, Hp - H)))          # (Hp, Hp)
    bout_p = jnp.pad(params["attn_b_out"], (0, Hp - H))[None, :]             # (1, Hp)
    wv_p = jnp.pad(params["lin_w"].T, ((0, Hp - H), (0, Vp - V)))            # (Hp, Vp)
    bv_p = jnp.pad(params["lin_b"], (0, Vp - V), constant_values=-1e30)[None, :]

    return dict(
        embedding=params["embedding"].astype(cdt),
        wih=wih_f.astype(cdt), bih=bih_f.astype(jnp.float32),
        whh=whh_f.astype(cdt), bhh=bhh_f.astype(jnp.float32),
        win=win_p.astype(cdt),
        wout_c=wout_c_p.astype(cdt), wout_o=wout_o_p.astype(cdt),
        bout=bout_p.astype(jnp.float32),
        wv=wv_p.astype(cdt), bv=bv_p.astype(jnp.float32),
    )


# ----------------------------------------------------------------------------
# Full Decoder forward (Pallas path)
# ----------------------------------------------------------------------------
@partial(jax.jit, static_argnames=("vocab_size", "batch_block"))
def decoder_forward(prep, encoder_out, x_lengths, batch_y, y_lengths, encoder_hidden,
                    *, vocab_size, batch_block=None):
    B, T = batch_y.shape
    H = encoder_hidden.shape[-1]
    Hp = prep["wout_o"].shape[0]
    cdt = prep["wih"].dtype

    # embedding gather directly in time-major order (no extra transpose op);
    # dropout is identity in eval mode.
    embed_tm = prep["embedding"][batch_y.T]                      # (T, B, E), compute dtype
    h0 = jnp.pad(encoder_hidden[0].astype(jnp.float32), ((0, 0), (0, Hp - H)))
    xlen = x_lengths.astype(jnp.int32).reshape(B, 1)
    ylen = y_lengths.astype(jnp.int32).reshape(B, 1)

    logp_pad, hT_pad = run_fused_decoder(
        xlen, ylen, embed_tm, h0, prep, encoder_out.astype(cdt), batch_block)

    # TODO(synk): at production sizes pad V to a 128 multiple upstream (or consume
    # the padded logp directly) so this slice is a no-op copy.
    return logp_pad[:, :, :vocab_size], hT_pad[None, :, :H]


# ----------------------------------------------------------------------------
# Pure-JAX reference (for correctness check), PyTorch-layout params, f32.
# ----------------------------------------------------------------------------
def decoder_forward_ref(params, encoder_out, x_lengths, batch_y, y_lengths, encoder_hidden):
    B, T = batch_y.shape
    S = encoder_out.shape[1]
    H = params["gru_w_hh"].shape[1]
    E2 = params["attn_w_in"].shape[1]
    embed = params["embedding"][batch_y]
    h0 = encoder_hidden[0]

    w_ih, w_hh = params["gru_w_ih"], params["gru_w_hh"]
    b_ih, b_hh = params["gru_b_ih"], params["gru_b_hh"]
    wr_i, wz_i, wn_i = w_ih[:H], w_ih[H:2 * H], w_ih[2 * H:]
    wr_h, wz_h, wn_h = w_hh[:H], w_hh[H:2 * H], w_hh[2 * H:]
    br_i, bz_i, bn_i = b_ih[:H], b_ih[H:2 * H], b_ih[2 * H:]
    br_h, bz_h, bn_h = b_hh[:H], b_hh[H:2 * H], b_hh[2 * H:]

    def step(h, inp):
        xt, t = inp
        r = jax.nn.sigmoid(xt @ wr_i.T + br_i + h @ wr_h.T + br_h)
        z = jax.nn.sigmoid(xt @ wz_i.T + bz_i + h @ wz_h.T + bz_h)
        n = jnp.tanh(xt @ wn_i.T + bn_i + r * (h @ wn_h.T + bn_h))
        h_new = (1.0 - z) * n + z * h
        valid = (t < y_lengths)[:, None]
        return jnp.where(valid, h_new, h), jnp.where(valid, h_new, 0.0)

    hT, outs = lax.scan(step, h0, (jnp.swapaxes(embed, 0, 1), jnp.arange(T)))
    out = jnp.swapaxes(outs, 0, 1)                               # (B, T, H)

    x_masks = jnp.arange(S)[None, :] < x_lengths[:, None]
    y_masks = jnp.arange(T)[None, :] < y_lengths[:, None]
    masks = ~(y_masks[:, :, None] & x_masks[:, None, :])
    ctx_in = encoder_out @ params["attn_w_in"].T
    atten = jnp.einsum("bth,bsh->bts", out, ctx_in)
    atten = jnp.where(masks, -1e-6, atten)
    atten = jax.nn.softmax(atten, axis=2)
    cvec = jnp.einsum("bts,bse->bte", atten, encoder_out)
    cat = jnp.concatenate([cvec, out], axis=-1)
    o = jnp.tanh(cat @ params["attn_w_out"].T + params["attn_b_out"])
    logits = o @ params["lin_w"].T + params["lin_b"]
    logp = jax.nn.log_softmax(logits, axis=-1)
    return logp, hT[None]


# ----------------------------------------------------------------------------
if __name__ == "__main__":
    B, S, T = 2, 8, 6
    V, E, Eh, Dh = 50, 16, 16, 32

    key = jax.random.PRNGKey(0)
    kp, k1, k2, k3 = jax.random.split(key, 4)
    params = init_params(kp, V, E, Eh, Dh)

    encoder_out = jax.random.normal(k1, (B, S, 2 * Eh), jnp.float32)
    encoder_hidden = jax.random.normal(k2, (1, B, Dh), jnp.float32)
    batch_y = jax.random.randint(k3, (B, T), 0, V).astype(jnp.int32)
    x_lengths = jnp.array([8, 5], jnp.int32)
    y_lengths = jnp.array([6, 4], jnp.int32)

    logp_ref, hidden_ref = decoder_forward_ref(
        params, encoder_out, x_lengths, batch_y, y_lengths, encoder_hidden)

    # --- f32 MXU operands: exact softmax divide -> tight agreement -------------
    prep32 = prepare_decoder_params(params, jnp.float32)
    logp, hidden = decoder_forward(prep32, encoder_out, x_lengths, batch_y,
                                   y_lengths, encoder_hidden, vocab_size=V)
    jax.block_until_ready((logp, hidden))
    assert logp.shape == (B, T, V) and hidden.shape == (1, B, Dh)
    assert jnp.allclose(logp, logp_ref, atol=2e-3, rtol=2e-3), (
        f"log_softmax mismatch (max abs diff {jnp.max(jnp.abs(logp - logp_ref))})")
    assert jnp.allclose(hidden, hidden_ref, atol=1e-3, rtol=1e-3), "hidden mismatch"

    # --- bf16 MXU operands (f32 accumulation / f32 VPU-EUP math): production ---
    prep16 = prepare_decoder_params(params, jnp.bfloat16)
    logp16, hidden16 = decoder_forward(prep16, encoder_out, x_lengths, batch_y,
                                       y_lengths, encoder_hidden, vocab_size=V)
    jax.block_until_ready((logp16, hidden16))
    assert bool(jnp.all(jnp.isfinite(logp16)))
    assert float(jnp.max(jnp.abs(logp16 - logp_ref))) < 0.5, "bf16 logp far off"
    assert float(jnp.max(jnp.abs(hidden16 - hidden_ref))) < 0.25, "bf16 hidden far off"

    print("KERNEL_OK")
</pallas_src>

<mosaic_0001>
module attributes {stable_mosaic.version = 11 : i64} {
  func.func @fused_decoder_kernel(%arg0: i32, %arg1: memref<2x1xi32, #tpu.memory_space<vmem>>, %arg2: memref<2x1xi32, #tpu.memory_space<vmem>>, %arg3: memref<6x2x16xf32, #tpu.memory_space<vmem>>, %arg4: memref<2x128xf32, #tpu.memory_space<vmem>>, %arg5: memref<16x384xf32, #tpu.memory_space<vmem>>, %arg6: memref<1x384xf32, #tpu.memory_space<vmem>>, %arg7: memref<128x384xf32, #tpu.memory_space<vmem>>, %arg8: memref<1x384xf32, #tpu.memory_space<vmem>>, %arg9: memref<2x8x32xf32, #tpu.memory_space<vmem>>, %arg10: memref<32x128xf32, #tpu.memory_space<vmem>>, %arg11: memref<32x128xf32, #tpu.memory_space<vmem>>, %arg12: memref<128x128xf32, #tpu.memory_space<vmem>>, %arg13: memref<1x128xf32, #tpu.memory_space<vmem>>, %arg14: memref<128x128xf32, #tpu.memory_space<vmem>>, %arg15: memref<1x128xf32, #tpu.memory_space<vmem>>, %arg16: memref<2x6x128xf32, #tpu.memory_space<vmem>>, %arg17: memref<2x128xf32, #tpu.memory_space<vmem>>, %arg18: memref<6x2x384xf32, #tpu.memory_space<vmem>>, %arg19: memref<2x6x128xf32, #tpu.memory_space<vmem>>) attributes {dimension_semantics = [#tpu.dimension_semantics<parallel>], iteration_bounds = array<i64: 1>, scalar_prefetch = 0 : i64, scratch_operands = 2 : i64, tpu.core_type = #tpu.core_type<tc>, window_params = [{transform_indices = @transform_0, window_bounds = array<i64: 2, 1>}, {transform_indices = @transform_1, window_bounds = array<i64: 2, 1>}, {transform_indices = @transform_2, window_bounds = array<i64: 6, 2, 16>}, {transform_indices = @transform_3, window_bounds = array<i64: 2, 128>}, {pipeline_mode = #tpu.pipeline_mode<synchronous>, transform_indices = @transform_4, window_bounds = array<i64: 16, 384>}, {pipeline_mode = #tpu.pipeline_mode<synchronous>, transform_indices = @transform_5, window_bounds = array<i64: 1, 384>}, {pipeline_mode = #tpu.pipeline_mode<synchronous>, transform_indices = @transform_6, window_bounds = array<i64: 128, 384>}, {pipeline_mode = #tpu.pipeline_mode<synchronous>, transform_indices = @transform_7, window_bounds = array<i64: 1, 384>}, {transform_indices = @transform_8, window_bounds = array<i64: 2, 8, 32>}, {pipeline_mode = #tpu.pipeline_mode<synchronous>, transform_indices = @transform_9, window_bounds = array<i64: 32, 128>}, {pipeline_mode = #tpu.pipeline_mode<synchronous>, transform_indices = @transform_10, window_bounds = array<i64: 32, 128>}, {pipeline_mode = #tpu.pipeline_mode<synchronous>, transform_indices = @transform_11, window_bounds = array<i64: 128, 128>}, {pipeline_mode = #tpu.pipeline_mode<synchronous>, transform_indices = @transform_12, window_bounds = array<i64: 1, 128>}, {pipeline_mode = #tpu.pipeline_mode<synchronous>, transform_indices = @transform_13, window_bounds = array<i64: 128, 128>}, {pipeline_mode = #tpu.pipeline_mode<synchronous>, transform_indices = @transform_14, window_bounds = array<i64: 1, 128>}, {transform_indices = @transform_15, window_bounds = array<i64: 2, 6, 128>}, {transform_indices = @transform_16, window_bounds = array<i64: 2, 128>}]} {
    %c0 = arith.constant 0 : index
    %c0_0 = arith.constant 0 : index
    %c0_1 = arith.constant 0 : index
    %0 = vector.load %arg3[%c0, %c0_0, %c0_1] : memref<6x2x16xf32, #tpu.memory_space<vmem>>, vector<6x2x16xf32>
    %1 = vector.shape_cast %0 : vector<6x2x16xf32> to vector<12x16xf32>
    %c0_2 = arith.constant 0 : index
    %c0_3 = arith.constant 0 : index
    %2 = vector.load %arg5[%c0_2, %c0_3] : memref<16x384xf32, #tpu.memory_space<vmem>>, vector<16x384xf32>
    %cst = arith.constant dense<0.000000e+00> : vector<12x384xf32>
    %3 = tpu.matmul %1, %2, %cst {dimension_numbers = #tpu.dot_dimension_numbers<[1], [0], [0], [1], [0, 0, 1, 1], [], []>} : vector<12x16xf32>, vector<16x384xf32>, vector<12x384xf32> -> vector<12x384xf32>
    %c0_4 = arith.constant 0 : index
    %c0_5 = arith.constant 0 : index
    %4 = vector.load %arg6[%c0_4, %c0_5] : memref<1x384xf32, #tpu.memory_space<vmem>>, vector<1x384xf32>
    %5 = vector.broadcast %4 : vector<1x384xf32> to vector<12x384xf32>
    %6 = arith.addf %3, %5 : vector<12x384xf32>
    %7 = vector.shape_cast %6 : vector<12x384xf32> to vector<6x2x384xf32>
    %c0_6 = arith.constant 0 : index
    %c0_7 = arith.constant 0 : index
    %c0_8 = arith.constant 0 : index
    %8 = vector.load %arg18[%c0_6, %c0_7, %c0_8] : memref<6x2x384xf32, #tpu.memory_space<vmem>>, vector<6x2x384xf32>
    tpu.vector_store %arg18[%c0_6, %c0_7, %c0_8], %7 {strides = array<i32>} : memref<6x2x384xf32, #tpu.memory_space<vmem>>, vector<6x2x384xf32>,
    %c0_9 = arith.constant 0 : index
    %c0_10 = arith.constant 0 : index
    %9 = vector.load %arg7[%c0_9, %c0_10] : memref<128x384xf32, #tpu.memory_space<vmem>>, vector<128x384xf32>
    %c0_11 = arith.constant 0 : index
    %c0_12 = arith.constant 0 : index
    %10 = vector.load %arg8[%c0_11, %c0_12] : memref<1x384xf32, #tpu.memory_space<vmem>>, vector<1x384xf32>
    %c0_13 = arith.constant 0 : index
    %c0_14 = arith.constant 0 : index
    %11 = vector.load %arg2[%c0_13, %c0_14] : memref<2x1xi32, #tpu.memory_space<vmem>>, vector<2x1xi32>
    %c0_15 = arith.constant 0 : index
    %c0_16 = arith.constant 0 : index
    %12 = vector.load %arg4[%c0_15, %c0_16] : memref<2x128xf32, #tpu.memory_space<vmem>>, vector<2x128xf32>
    %c0_17 = arith.constant 0 : index
    %c0_18 = arith.constant 0 : index
    %c0_19 = arith.constant 0 : index
    %13 = vector.load %arg18[%c0_17, %c0_18, %c0_19] : memref<6x2x384xf32, #tpu.memory_space<vmem>>, vector<1x2x384xf32>
    %14 = vector.shape_cast %13 : vector<1x2x384xf32> to vector<2x384xf32>
    %cst_20 = arith.constant dense<0.000000e+00> : vector<2x384xf32>
    %15 = tpu.matmul %12, %9, %cst_20 {dimension_numbers = #tpu.dot_dimension_numbers<[1], [0], [0], [1], [0, 0, 1, 1], [], []>} : vector<2x128xf32>, vector<128x384xf32>, vector<2x384xf32> -> vector<2x384xf32>
    %16 = vector.broadcast %10 : vector<1x384xf32> to vector<2x384xf32>
    %17 = arith.addf %15, %16 : vector<2x384xf32>
    %18 = vector.extract_strided_slice %14 {offsets = [0, 0], sizes = [2, 128], strides = [1, 1]} : vector<2x384xf32> to vector<2x128xf32>
    %19 = vector.extract_strided_slice %17 {offsets = [0, 0], sizes = [2, 128], strides = [1, 1]} : vector<2x384xf32> to vector<2x128xf32>
    %20 = arith.addf %18, %19 : vector<2x128xf32>
    %21 = arith.negf %20 : vector<2x128xf32>
    %22 = math.exp %21 : vector<2x128xf32>
    %cst_21 = arith.constant 1.000000e+00 : f32
    %23 = vector.broadcast %cst_21 : f32 to vector<2x128xf32>
    %24 = arith.addf %23, %22 : vector<2x128xf32>
    %25 = arith.divf %23, %24 : vector<2x128xf32>
    %26 = vector.extract_strided_slice %14 {offsets = [0, 128], sizes = [2, 128], strides = [1, 1]} : vector<2x384xf32> to vector<2x128xf32>
    %27 = vector.extract_strided_slice %17 {offsets = [0, 128], sizes = [2, 128], strides = [1, 1]} : vector<2x384xf32> to vector<2x128xf32>
    %28 = arith.addf %26, %27 : vector<2x128xf32>
    %29 = arith.negf %28 : vector<2x128xf32>
    %30 = math.exp %29 : vector<2x128xf32>
    %cst_22 = arith.constant 1.000000e+00 : f32
    %31 = vector.broadcast %cst_22 : f32 to vector<2x128xf32>
    %32 = arith.addf %31, %30 : vector<2x128xf32>
    %33 = arith.divf %31, %32 : vector<2x128xf32>
    %34 = vector.extract_strided_slice %14 {offsets = [0, 256], sizes = [2, 128], strides = [1, 1]} : vector<2x384xf32> to vector<2x128xf32>
    %35 = vector.extract_strided_slice %17 {offsets = [0, 256], sizes = [2, 128], strides = [1, 1]} : vector<2x384xf32> to vector<2x128xf32>
    %36 = arith.mulf %25, %35 : vector<2x128xf32>
    %37 = arith.addf %34, %36 : vector<2x128xf32>
    %38 = math.tanh %37 : vector<2x128xf32>
    %cst_23 = arith.constant 1.000000e+00 : f32
    %39 = vector.broadcast %cst_23 : f32 to vector<2x128xf32>
    %40 = arith.subf %39, %33 : vector<2x128xf32>
    %41 = arith.mulf %40, %38 : vector<2x128xf32>
    %42 = arith.mulf %33, %12 : vector<2x128xf32>
    %43 = arith.addf %41, %42 : vector<2x128xf32>
    %c0_i32 = arith.constant 0 : i32
    %44 = vector.broadcast %c0_i32 : i32 to vector<2x1xi32>
    %45 = arith.cmpi sgt, %11, %44 : vector<2x1xi32>
    %cst_24 = arith.constant 0.000000e+00 : f32
    %46 = vector.shape_cast %45 : vector<2x1xi1> to vector<2x1xi1>
    %47 = vector.broadcast %46 : vector<2x1xi1> to vector<2x128xi1>
    %48 = vector.broadcast %cst_24 : f32 to vector<2x128xf32>
    %49 = arith.select %47, %43, %48 : vector<2x128xi1>, vector<2x128xf32>
    %50 = vector.shape_cast %49 : vector<2x128xf32> to vector<2x1x128xf32>
    %c0_25 = arith.constant 0 : index
    %c0_26 = arith.constant 0 : index
    %c0_27 = arith.constant 0 : index
    %51 = vector.load %arg19[%c0_25, %c0_26, %c0_27] : memref<2x6x128xf32, #tpu.memory_space<vmem>>, vector<2x1x128xf32>
    tpu.vector_store %arg19[%c0_25, %c0_26, %c0_27], %50 {strides = array<i32>} : memref<2x6x128xf32, #tpu.memory_space<vmem>>, vector<2x1x128xf32>,
    %52 = vector.shape_cast %45 : vector<2x1xi1> to vector<2x1xi1>
    %53 = vector.broadcast %52 : vector<2x1xi1> to vector<2x128xi1>
    %54 = arith.select %53, %43, %12 : vector<2x128xi1>, vector<2x128xf32>
    %c1 = arith.constant 1 : index
    %c0_28 = arith.constant 0 : index
    %c0_29 = arith.constant 0 : index
    %55 = vector.load %arg18[%c1, %c0_28, %c0_29] : memref<6x2x384xf32, #tpu.memory_space<vmem>>, vector<1x2x384xf32>
    %56 = vector.shape_cast %55 : vector<1x2x384xf32> to vector<2x384xf32>
    %cst_30 = arith.constant dense<0.000000e+00> : vector<2x384xf32>
    %57 = tpu.matmul %54, %9, %cst_30 {dimension_numbers = #tpu.dot_dimension_numbers<[1], [0], [0], [1], [0, 0, 1, 1], [], []>} : vector<2x128xf32>, vector<128x384xf32>, vector<2x384xf32> -> vector<2x384xf32>
    %58 = vector.broadcast %10 : vector<1x384xf32> to vector<2x384xf32>
    %59 = arith.addf %57, %58 : vector<2x384xf32>
    %60 = vector.extract_strided_slice %56 {offsets = [0, 0], sizes = [2, 128], strides = [1, 1]} : vector<2x384xf32> to vector<2x128xf32>
    %61 = vector.extract_strided_slice %59 {offsets = [0, 0], sizes = [2, 128], strides = [1, 1]} : vector<2x384xf32> to vector<2x128xf32>
    %62 = arith.addf %60, %61 : vector<2x128xf32>
    %63 = arith.negf %62 : vector<2x128xf32>
    %64 = math.exp %63 : vector<2x128xf32>
    %cst_31 = arith.constant 1.000000e+00 : f32
    %65 = vector.broadcast %cst_31 : f32 to vector<2x128xf32>
    %66 = arith.addf %65, %64 : vector<2x128xf32>
    %67 = arith.divf %65, %66 : vector<2x128xf32>
    %68 = vector.extract_strided_slice %56 {offsets = [0, 128], sizes = [2, 128], strides = [1, 1]} : vector<2x384xf32> to vector<2x128xf32>
    %69 = vector.extract_strided_slice %59 {offsets = [0, 128], sizes = [2, 128], strides = [1, 1]} : vector<2x384xf32> to vector<2x128xf32>
    %70 = arith.addf %68, %69 : vector<2x128xf32>
    %71 = arith.negf %70 : vector<2x128xf32>
    %72 = math.exp %71 : vector<2x128xf32>
    %cst_32 = arith.constant 1.000000e+00 : f32
    %73 = vector.broadcast %cst_32 : f32 to vector<2x128xf32>
    %74 = arith.addf %73, %72 : vector<2x128xf32>
    %75 = arith.divf %73, %74 : vector<2x128xf32>
    %76 = vector.extract_strided_slice %56 {offsets = [0, 256], sizes = [2, 128], strides = [1, 1]} : vector<2x384xf32> to vector<2x128xf32>
    %77 = vector.extract_strided_slice %59 {offsets = [0, 256], sizes = [2, 128], strides = [1, 1]} : vector<2x384xf32> to vector<2x128xf32>
    %78 = arith.mulf %67, %77 : vector<2x128xf32>
    %79 = arith.addf %76, %78 : vector<2x128xf32>
    %80 = math.tanh %79 : vector<2x128xf32>
    %cst_33 = arith.constant 1.000000e+00 : f32
    %81 = vector.broadcast %cst_33 : f32 to vector<2x128xf32>
    %82 = arith.subf %81, %75 : vector<2x128xf32>
    %83 = arith.mulf %82, %80 : vector<2x128xf32>
    %84 = arith.mulf %75, %54 : vector<2x128xf32>
    %85 = arith.addf %83, %84 : vector<2x128xf32>
    %c1_i32 = arith.constant 1 : i32
    %86 = vector.broadcast %c1_i32 : i32 to vector<2x1xi32>
    %87 = arith.cmpi sgt, %11, %86 : vector<2x1xi32>
    %cst_34 = arith.constant 0.000000e+00 : f32
    %88 = vector.shape_cast %87 : vector<2x1xi1> to vector<2x1xi1>
    %89 = vector.broadcast %88 : vector<2x1xi1> to vector<2x128xi1>
    %90 = vector.broadcast %cst_34 : f32 to vector<2x128xf32>
    %91 = arith.select %89, %85, %90 : vector<2x128xi1>, vector<2x128xf32>
    %92 = vector.shape_cast %91 : vector<2x128xf32> to vector<2x1x128xf32>
    %c0_35 = arith.constant 0 : index
    %c1_36 = arith.constant 1 : index
    %c0_37 = arith.constant 0 : index
    %93 = vector.load %arg19[%c0_35, %c1_36, %c0_37] : memref<2x6x128xf32, #tpu.memory_space<vmem>>, vector<2x1x128xf32>
    tpu.vector_store %arg19[%c0_35, %c1_36, %c0_37], %92 {strides = array<i32>} : memref<2x6x128xf32, #tpu.memory_space<vmem>>, vector<2x1x128xf32>,
    %94 = vector.shape_cast %87 : vector<2x1xi1> to vector<2x1xi1>
    %95 = vector.broadcast %94 : vector<2x1xi1> to vector<2x128xi1>
    %96 = arith.select %95, %85, %54 : vector<2x128xi1>, vector<2x128xf32>
    %c2 = arith.constant 2 : index
    %c0_38 = arith.constant 0 : index
    %c0_39 = arith.constant 0 : index
    %97 = vector.load %arg18[%c2, %c0_38, %c0_39] : memref<6x2x384xf32, #tpu.memory_space<vmem>>, vector<1x2x384xf32>
    %98 = vector.shape_cast %97 : vector<1x2x384xf32> to vector<2x384xf32>
    %cst_40 = arith.constant dense<0.000000e+00> : vector<2x384xf32>
    %99 = tpu.matmul %96, %9, %cst_40 {dimension_numbers = #tpu.dot_dimension_numbers<[1], [0], [0], [1], [0, 0, 1, 1], [], []>} : vector<2x128xf32>, vector<128x384xf32>, vector<2x384xf32> -> vector<2x384xf32>
    %100 = vector.broadcast %10 : vector<1x384xf32> to vector<2x384xf32>
    %101 = arith.addf %99, %100 : vector<2x384xf32>
    %102 = vector.extract_strided_slice %98 {offsets = [0, 0], sizes = [2, 128], strides = [1, 1]} : vector<2x384xf32> to vector<2x128xf32>
    %103 = vector.extract_strided_slice %101 {offsets = [0, 0], sizes = [2, 128], strides = [1, 1]} : vector<2x384xf32> to vector<2x128xf32>
    %104 = arith.addf %102, %103 : vector<2x128xf32>
    %105 = arith.negf %104 : vector<2x128xf32>
    %106 = math.exp %105 : vector<2x128xf32>
    %cst_41 = arith.constant 1.000000e+00 : f32
    %107 = vector.broadcast %cst_41 : f32 to vector<2x128xf32>
    %108 = arith.addf %107, %106 : vector<2x128xf32>
    %109 = arith.divf %107, %108 : vector<2x128xf32>
    %110 = vector.extract_strided_slice %98 {offsets = [0, 128], sizes = [2, 128], strides = [1, 1]} : vector<2x384xf32> to vector<2x128xf32>
    %111 = vector.extract_strided_slice %101 {offsets = [0, 128], sizes = [2, 128], strides = [1, 1]} : vector<2x384xf32> to vector<2x128xf32>
    %112 = arith.addf %110, %111 : vector<2x128xf32>
    %113 = arith.negf %112 : vector<2x128xf32>
    %114 = math.exp %113 : vector<2x128xf32>
    %cst_42 = arith.constant 1.000000e+00 : f32
    %115 = vector.broadcast %cst_42 : f32 to vector<2x128xf32>
    %116 = arith.addf %115, %114 : vector<2x128xf32>
    %117 = arith.divf %115, %116 : vector<2x128xf32>
    %118 = vector.extract_strided_slice %98 {offsets = [0, 256], sizes = [2, 128], strides = [1, 1]} : vector<2x384xf32> to vector<2x128xf32>
    %119 = vector.extract_strided_slice %101 {offsets = [0, 256], sizes = [2, 128], strides = [1, 1]} : vector<2x384xf32> to vector<2x128xf32>
    %120 = arith.mulf %109, %119 : vector<2x128xf32>
    %121 = arith.addf %118, %120 : vector<2x128xf32>
    %122 = math.tanh %121 : vector<2x128xf32>
    %cst_43 = arith.constant 1.000000e+00 : f32
    %123 = vector.broadcast %cst_43 : f32 to vector<2x128xf32>
    %124 = arith.subf %123, %117 : vector<2x128xf32>
    %125 = arith.mulf %124, %122 : vector<2x128xf32>
    %126 = arith.mulf %117, %96 : vector<2x128xf32>
    %127 = arith.addf %125, %126 : vector<2x128xf32>
    %c2_i32 = arith.constant 2 : i32
    %128 = vector.broadcast %c2_i32 : i32 to vector<2x1xi32>
    %129 = arith.cmpi sgt, %11, %128 : vector<2x1xi32>
    %cst_44 = arith.constant 0.000000e+00 : f32
    %130 = vector.shape_cast %129 : vector<2x1xi1> to vector<2x1xi1>
    %131 = vector.broadcast %130 : vector<2x1xi1> to vector<2x128xi1>
    %132 = vector.broadcast %cst_44 : f32 to vector<2x128xf32>
    %133 = arith.select %131, %127, %132 : vector<2x128xi1>, vector<2x128xf32>
    %134 = vector.shape_cast %133 : vector<2x128xf32> to vector<2x1x128xf32>
    %c0_45 = arith.constant 0 : index
    %c2_46 = arith.constant 2 : index
    %c0_47 = arith.constant 0 : index
    %135 = vector.load %arg19[%c0_45, %c2_46, %c0_47] : memref<2x6x128xf32, #tpu.memory_space<vmem>>, vector<2x1x128xf32>
    tpu.vector_store %arg19[%c0_45, %c2_46, %c0_47], %134 {strides = array<i32>} : memref<2x6x128xf32, #tpu.memory_space<vmem>>, vector<2x1x128xf32>,
    %136 = vector.shape_cast %129 : vector<2x1xi1> to vector<2x1xi1>
    %137 = vector.broadcast %136 : vector<2x1xi1> to vector<2x128xi1>
    %138 = arith.select %137, %127, %96 : vector<2x128xi1>, vector<2x128xf32>
    %c3 = arith.constant 3 : index
    %c0_48 = arith.constant 0 : index
    %c0_49 = arith.constant 0 : index
    %139 = vector.load %arg18[%c3, %c0_48, %c0_49] : memref<6x2x384xf32, #tpu.memory_space<vmem>>, vector<1x2x384xf32>
    %140 = vector.shape_cast %139 : vector<1x2x384xf32> to vector<2x384xf32>
    %cst_50 = arith.constant dense<0.000000e+00> : vector<2x384xf32>
    %141 = tpu.matmul %138, %9, %cst_50 {dimension_numbers = #tpu.dot_dimension_numbers<[1], [0], [0], [1], [0, 0, 1, 1], [], []>} : vector<2x128xf32>, vector<128x384xf32>, vector<2x384xf32> -> vector<2x384xf32>
    %142 = vector.broadcast %10 : vector<1x384xf32> to vector<2x384xf32>
    %143 = arith.addf %141, %142 : vector<2x384xf32>
    %144 = vector.extract_strided_slice %140 {offsets = [0, 0], sizes = [2, 128], strides = [1, 1]} : vector<2x384xf32> to vector<2x128xf32>
    %145 = vector.extract_strided_slice %143 {offsets = [0, 0], sizes = [2, 128], strides = [1, 1]} : vector<2x384xf32> to vector<2x128xf32>
    %146 = arith.addf %144, %145 : vector<2x128xf32>
    %147 = arith.negf %146 : vector<2x128xf32>
    %148 = math.exp %147 : vector<2x128xf32>
    %cst_51 = arith.constant 1.000000e+00 : f32
    %149 = vector.broadcast %cst_51 : f32 to vector<2x128xf32>
    %150 = arith.addf %149, %148 : vector<2x128xf32>
    %151 = arith.divf %149, %150 : vector<2x128xf32>
    %152 = vector.extract_strided_slice %140 {offsets = [0, 128], sizes = [2, 128], strides = [1, 1]} : vector<2x384xf32> to vector<2x128xf32>
    %153 = vector.extract_strided_slice %143 {offsets = [0, 128], sizes = [2, 128], strides = [1, 1]} : vector<2x384xf32> to vector<2x128xf32>
    %154 = arith.addf %152, %153 : vector<2x128xf32>
    %155 = arith.negf %154 : vector<2x128xf32>
    %156 = math.exp %155 : vector<2x128xf32>
    %cst_52 = arith.constant 1.000000e+00 : f32
    %157 = vector.broadcast %cst_52 : f32 to vector<2x128xf32>
    %158 = arith.addf %157, %156 : vector<2x128xf32>
    %159 = arith.divf %157, %158 : vector<2x128xf32>
    %160 = vector.extract_strided_slice %140 {offsets = [0, 256], sizes = [2, 128], strides = [1, 1]} : vector<2x384xf32> to vector<2x128xf32>
    %161 = vector.extract_strided_slice %143 {offsets = [0, 256], sizes = [2, 128], strides = [1, 1]} : vector<2x384xf32> to vector<2x128xf32>
    %162 = arith.mulf %151, %161 : vector<2x128xf32>
    %163 = arith.addf %160, %162 : vector<2x128xf32>
    %164 = math.tanh %163 : vector<2x128xf32>
    %cst_53 = arith.constant 1.000000e+00 : f32
    %165 = vector.broadcast %cst_53 : f32 to vector<2x128xf32>
    %166 = arith.subf %165, %159 : vector<2x128xf32>
    %167 = arith.mulf %166, %164 : vector<2x128xf32>
    %168 = arith.mulf %159, %138 : vector<2x128xf32>
    %169 = arith.addf %167, %168 : vector<2x128xf32>
    %c3_i32 = arith.constant 3 : i32
    %170 = vector.broadcast %c3_i32 : i32 to vector<2x1xi32>
    %171 = arith.cmpi sgt, %11, %170 : vector<2x1xi32>
    %cst_54 = arith.constant 0.000000e+00 : f32
    %172 = vector.shape_cast %171 : vector<2x1xi1> to vector<2x1xi1>
    %173 = vector.broadcast %172 : vector<2x1xi1> to vector<2x128xi1>
    %174 = vector.broadcast %cst_54 : f32 to vector<2x128xf32>
    %175 = arith.select %173, %169, %174 : vector<2x128xi1>, vector<2x128xf32>
    %176 = vector.shape_cast %175 : vector<2x128xf32> to vector<2x1x128xf32>
    %c0_55 = arith.constant 0 : index
    %c3_56 = arith.constant 3 : index
    %c0_57 = arith.constant 0 : index
    %177 = vector.load %arg19[%c0_55, %c3_56, %c0_57] : memref<2x6x128xf32, #tpu.memory_space<vmem>>, vector<2x1x128xf32>
    tpu.vector_store %arg19[%c0_55, %c3_56, %c0_57], %176 {strides = array<i32>} : memref<2x6x128xf32, #tpu.memory_space<vmem>>, vector<2x1x128xf32>,
    %178 = vector.shape_cast %171 : vector<2x1xi1> to vector<2x1xi1>
    %179 = vector.broadcast %178 : vector<2x1xi1> to vector<2x128xi1>
    %180 = arith.select %179, %169, %138 : vector<2x128xi1>, vector<2x128xf32>
    %c4 = arith.constant 4 : index
    %c0_58 = arith.constant 0 : index
    %c0_59 = arith.constant 0 : index
    %181 = vector.load %arg18[%c4, %c0_58, %c0_59] : memref<6x2x384xf32, #tpu.memory_space<vmem>>, vector<1x2x384xf32>
    %182 = vector.shape_cast %181 : vector<1x2x384xf32> to vector<2x384xf32>
    %cst_60 = arith.constant dense<0.000000e+00> : vector<2x384xf32>
    %183 = tpu.matmul %180, %9, %cst_60 {dimension_numbers = #tpu.dot_dimension_numbers<[1], [0], [0], [1], [0, 0, 1, 1], [], []>} : vector<2x128xf32>, vector<128x384xf32>, vector<2x384xf32> -> vector<2x384xf32>
    %184 = vector.broadcast %10 : vector<1x384xf32> to vector<2x384xf32>
    %185 = arith.addf %183, %184 : vector<2x384xf32>
    %186 = vector.extract_strided_slice %182 {offsets = [0, 0], sizes = [2, 128], strides = [1, 1]} : vector<2x384xf32> to vector<2x128xf32>
    %187 = vector.extract_strided_slice %185 {offsets = [0, 0], sizes = [2, 128], strides = [1, 1]} : vector<2x384xf32> to vector<2x128xf32>
    %188 = arith.addf %186, %187 : vector<2x128xf32>
    %189 = arith.negf %188 : vector<2x128xf32>
    %190 = math.exp %189 : vector<2x128xf32>
    %cst_61 = arith.constant 1.000000e+00 : f32
    %191 = vector.broadcast %cst_61 : f32 to vector<2x128xf32>
    %192 = arith.addf %191, %190 : vector<2x128xf32>
    %193 = arith.divf %191, %192 : vector<2x128xf32>
    %194 = vector.extract_strided_slice %182 {offsets = [0, 128], sizes = [2, 128], strides = [1, 1]} : vector<2x384xf32> to vector<2x128xf32>
    %195 = vector.extract_strided_slice %185 {offsets = [0, 128], sizes = [2, 128], strides = [1, 1]} : vector<2x384xf32> to vector<2x128xf32>
    %196 = arith.addf %194, %195 : vector<2x128xf32>
    %197 = arith.negf %196 : vector<2x128xf32>
    %198 = math.exp %197 : vector<2x128xf32>
    %cst_62 = arith.constant 1.000000e+00 : f32
    %199 = vector.broadcast %cst_62 : f32 to vector<2x128xf32>
    %200 = arith.addf %199, %198 : vector<2x128xf32>
    %201 = arith.divf %199, %200 : vector<2x128xf32>
    %202 = vector.extract_strided_slice %182 {offsets = [0, 256], sizes = [2, 128], strides = [1, 1]} : vector<2x384xf32> to vector<2x128xf32>
    %203 = vector.extract_strided_slice %185 {offsets = [0, 256], sizes = [2, 128], strides = [1, 1]} : vector<2x384xf32> to vector<2x128xf32>
    %204 = arith.mulf %193, %203 : vector<2x128xf32>
    %205 = arith.addf %202, %204 : vector<2x128xf32>
    %206 = math.tanh %205 : vector<2x128xf32>
    %cst_63 = arith.constant 1.000000e+00 : f32
    %207 = vector.broadcast %cst_63 : f32 to vector<2x128xf32>
    %208 = arith.subf %207, %201 : vector<2x128xf32>
    %209 = arith.mulf %208, %206 : vector<2x128xf32>
    %210 = arith.mulf %201, %180 : vector<2x128xf32>
    %211 = arith.addf %209, %210 : vector<2x128xf32>
    %c4_i32 = arith.constant 4 : i32
    %212 = vector.broadcast %c4_i32 : i32 to vector<2x1xi32>
    %213 = arith.cmpi sgt, %11, %212 : vector<2x1xi32>
    %cst_64 = arith.constant 0.000000e+00 : f32
    %214 = vector.shape_cast %213 : vector<2x1xi1> to vector<2x1xi1>
    %215 = vector.broadcast %214 : vector<2x1xi1> to vector<2x128xi1>
    %216 = vector.broadcast %cst_64 : f32 to vector<2x128xf32>
    %217 = arith.select %215, %211, %216 : vector<2x128xi1>, vector<2x128xf32>
    %218 = vector.shape_cast %217 : vector<2x128xf32> to vector<2x1x128xf32>
    %c0_65 = arith.constant 0 : index
    %c4_66 = arith.constant 4 : index
    %c0_67 = arith.constant 0 : index
    %219 = vector.load %arg19[%c0_65, %c4_66, %c0_67] : memref<2x6x128xf32, #tpu.memory_space<vmem>>, vector<2x1x128xf32>
    tpu.vector_store %arg19[%c0_65, %c4_66, %c0_67], %218 {strides = array<i32>} : memref<2x6x128xf32, #tpu.memory_space<vmem>>, vector<2x1x128xf32>,
    %220 = vector.shape_cast %213 : vector<2x1xi1> to vector<2x1xi1>
    %221 = vector.broadcast %220 : vector<2x1xi1> to vector<2x128xi1>
    %222 = arith.select %221, %211, %180 : vector<2x128xi1>, vector<2x128xf32>
    %c5 = arith.constant 5 : index
    %c0_68 = arith.constant 0 : index
    %c0_69 = arith.constant 0 : index
    %223 = vector.load %arg18[%c5, %c0_68, %c0_69] : memref<6x2x384xf32, #tpu.memory_space<vmem>>, vector<1x2x384xf32>
    %224 = vector.shape_cast %223 : vector<1x2x384xf32> to vector<2x384xf32>
    %cst_70 = arith.constant dense<0.000000e+00> : vector<2x384xf32>
    %225 = tpu.matmul %222, %9, %cst_70 {dimension_numbers = #tpu.dot_dimension_numbers<[1], [0], [0], [1], [0, 0, 1, 1], [], []>} : vector<2x128xf32>, vector<128x384xf32>, vector<2x384xf32> -> vector<2x384xf32>
    %226 = vector.broadcast %10 : vector<1x384xf32> to vector<2x384xf32>
    %227 = arith.addf %225, %226 : vector<2x384xf32>
    %228 = vector.extract_strided_slice %224 {offsets = [0, 0], sizes = [2, 128], strides = [1, 1]} : vector<2x384xf32> to vector<2x128xf32>
    %229 = vector.extract_strided_slice %227 {offsets = [0, 0], sizes = [2, 128], strides = [1, 1]} : vector<2x384xf32> to vector<2x128xf32>
    %230 = arith.addf %228, %229 : vector<2x128xf32>
    %231 = arith.negf %230 : vector<2x128xf32>
    %232 = math.exp %231 : vector<2x128xf32>
    %cst_71 = arith.constant 1.000000e+00 : f32
    %233 = vector.broadcast %cst_71 : f32 to vector<2x128xf32>
    %234 = arith.addf %233, %232 : vector<2x128xf32>
    %235 = arith.divf %233, %234 : vector<2x128xf32>
    %236 = vector.extract_strided_slice %224 {offsets = [0, 128], sizes = [2, 128], strides = [1, 1]} : vector<2x384xf32> to vector<2x128xf32>
    %237 = vector.extract_strided_slice %227 {offsets = [0, 128], sizes = [2, 128], strides = [1, 1]} : vector<2x384xf32> to vector<2x128xf32>
    %238 = arith.addf %236, %237 : vector<2x128xf32>
    %239 = arith.negf %238 : vector<2x128xf32>
    %240 = math.exp %239 : vector<2x128xf32>
    %cst_72 = arith.constant 1.000000e+00 : f32
    %241 = vector.broadcast %cst_72 : f32 to vector<2x128xf32>
    %242 = arith.addf %241, %240 : vector<2x128xf32>
    %243 = arith.divf %241, %242 : vector<2x128xf32>
    %244 = vector.extract_strided_slice %224 {offsets = [0, 256], sizes = [2, 128], strides = [1, 1]} : vector<2x384xf32> to vector<2x128xf32>
    %245 = vector.extract_strided_slice %227 {offsets = [0, 256], sizes = [2, 128], strides = [1, 1]} : vector<2x384xf32> to vector<2x128xf32>
    %246 = arith.mulf %235, %245 : vector<2x128xf32>
    %247 = arith.addf %244, %246 : vector<2x128xf32>
    %248 = math.tanh %247 : vector<2x128xf32>
    %cst_73 = arith.constant 1.000000e+00 : f32
    %249 = vector.broadcast %cst_73 : f32 to vector<2x128xf32>
    %250 = arith.subf %249, %243 : vector<2x128xf32>
    %251 = arith.mulf %250, %248 : vector<2x128xf32>
    %252 = arith.mulf %243, %222 : vector<2x128xf32>
    %253 = arith.addf %251, %252 : vector<2x128xf32>
    %c5_i32 = arith.constant 5 : i32
    %254 = vector.broadcast %c5_i32 : i32 to vector<2x1xi32>
    %255 = arith.cmpi sgt, %11, %254 : vector<2x1xi32>
    %cst_74 = arith.constant 0.000000e+00 : f32
    %256 = vector.shape_cast %255 : vector<2x1xi1> to vector<2x1xi1>
    %257 = vector.broadcast %256 : vector<2x1xi1> to vector<2x128xi1>
    %258 = vector.broadcast %cst_74 : f32 to vector<2x128xf32>
    %259 = arith.select %257, %253, %258 : vector<2x128xi1>, vector<2x128xf32>
    %260 = vector.shape_cast %259 : vector<2x128xf32> to vector<2x1x128xf32>
    %c0_75 = arith.constant 0 : index
    %c5_76 = arith.constant 5 : index
    %c0_77 = arith.constant 0 : index
    %261 = vector.load %arg19[%c0_75, %c5_76, %c0_77] : memref<2x6x128xf32, #tpu.memory_space<vmem>>, vector<2x1x128xf32>
    tpu.vector_store %arg19[%c0_75, %c5_76, %c0_77], %260 {strides = array<i32>} : memref<2x6x128xf32, #tpu.memory_space<vmem>>, vector<2x1x128xf32>,
    %262 = vector.shape_cast %255 : vector<2x1xi1> to vector<2x1xi1>
    %263 = vector.broadcast %262 : vector<2x1xi1> to vector<2x128xi1>
    %264 = arith.select %263, %253, %222 : vector<2x128xi1>, vector<2x128xf32>
    %c0_78 = arith.constant 0 : index
    %c0_79 = arith.constant 0 : index
    %265 = vector.load %arg17[%c0_78, %c0_79] : memref<2x128xf32, #tpu.memory_space<vmem>>, vector<2x128xf32>
    tpu.vector_store %arg17[%c0_78, %c0_79], %264 {strides = array<i32>} : memref<2x128xf32, #tpu.memory_space<vmem>>, vector<2x128xf32>,
    %c0_80 = arith.constant 0 : index
    %c0_81 = arith.constant 0 : index
    %c0_82 = arith.constant 0 : index
    %266 = vector.load %arg19[%c0_80, %c0_81, %c0_82] : memref<2x6x128xf32, #tpu.memory_space<vmem>>, vector<2x6x128xf32>
    %c0_83 = arith.constant 0 : index
    %c0_84 = arith.constant 0 : index
    %c0_85 = arith.constant 0 : index
    %267 = vector.load %arg9[%c0_83, %c0_84, %c0_85] : memref<2x8x32xf32, #tpu.memory_space<vmem>>, vector<2x8x32xf32>
    %268 = vector.shape_cast %267 : vector<2x8x32xf32> to vector<16x32xf32>
    %c0_86 = arith.constant 0 : index
    %c0_87 = arith.constant 0 : index
    %269 = vector.load %arg10[%c0_86, %c0_87] : memref<32x128xf32, #tpu.memory_space<vmem>>, vector<32x128xf32>
    %cst_88 = arith.constant dense<0.000000e+00> : vector<16x128xf32>
    %270 = tpu.matmul %268, %269, %cst_88 {dimension_numbers = #tpu.dot_dimension_numbers<[1], [0], [0], [1], [0, 0, 1, 1], [], []>} : vector<16x32xf32>, vector<32x128xf32>, vector<16x128xf32> -> vector<16x128xf32>
    %271 = vector.shape_cast %270 : vector<16x128xf32> to vector<2x8x128xf32>
    "tpu.trace_start"() <{level = 10 : i32, message = "bth,bsh->bts"}> : () -> ()
    %cst_89 = arith.constant dense<0.000000e+00> : vector<2x6x8xf32>
    %272 = tpu.matmul %266, %271, %cst_89 {dimension_numbers = #tpu.dot_dimension_numbers<[2], [2], [1], [1], [0, 0, 0, 1, 1, 1], [0], [0]>} : vector<2x6x128xf32>, vector<2x8x128xf32>, vector<2x6x8xf32> -> vector<2x6x8xf32>
    "tpu.trace_stop"() : () -> ()
    %273 = tpu.iota {dimensions = array<i32: 1>} : vector<2x6x8xi32>
    %274 = tpu.iota {dimensions = array<i32: 2>} : vector<2x6x8xi32>
    %275 = vector.shape_cast %11 : vector<2x1xi32> to vector<2x1x1xi32>
    %276 = vector.broadcast %275 : vector<2x1x1xi32> to vector<2x6x8xi32>
    %277 = arith.cmpi slt, %273, %276 : vector<2x6x8xi32>
    %c0_90 = arith.constant 0 : index
    %c0_91 = arith.constant 0 : index
    %278 = vector.load %arg1[%c0_90, %c0_91] : memref<2x1xi32, #tpu.memory_space<vmem>>, vector<2x1xi32>
    %279 = vector.shape_cast %278 : vector<2x1xi32> to vector<2x1x1xi32>
    %280 = vector.broadcast %279 : vector<2x1x1xi32> to vector<2x6x8xi32>
    %281 = arith.cmpi slt, %274, %280 : vector<2x6x8xi32>
    %282 = arith.andi %277, %281 : vector<2x6x8xi1>
    %cst_92 = arith.constant -9.99999997E-7 : f32
    %283 = vector.broadcast %cst_92 : f32 to vector<2x6x8xf32>
    %284 = arith.select %282, %272, %283 : vector<2x6x8xi1>, vector<2x6x8xf32>
    %cst_93 = arith.constant dense<0xFF800000> : vector<2x6xf32>
    %285 = vector.multi_reduction <maximumf>, %284, %cst_93 [2] : vector<2x6x8xf32> to vector<2x6xf32>
    %286 = vector.shape_cast %285 : vector<2x6xf32> to vector<2x6x1xf32>
    %287 = vector.broadcast %286 : vector<2x6x1xf32> to vector<2x6x8xf32>
    %288 = arith.subf %284, %287 : vector<2x6x8xf32>
    %289 = math.exp %288 : vector<2x6x8xf32>
    %cst_94 = arith.constant dense<0.000000e+00> : vector<2x6xf32>
    %290 = vector.multi_reduction <add>, %289, %cst_94 [2] : vector<2x6x8xf32> to vector<2x6xf32>
    %291 = vector.shape_cast %290 : vector<2x6xf32> to vector<2x6x1xf32>
    %292 = vector.broadcast %291 : vector<2x6x1xf32> to vector<2x6x8xf32>
    %293 = arith.divf %289, %292 : vector<2x6x8xf32>
    "tpu.trace_start"() <{level = 10 : i32, message = "bts,bse->bte"}> : () -> ()
    %cst_95 = arith.constant dense<0.000000e+00> : vector<2x6x32xf32>
    %294 = tpu.matmul %293, %267, %cst_95 {dimension_numbers = #tpu.dot_dimension_numbers<[2], [1], [1], [2], [0, 0, 0, 1, 1, 2], [0], [0]>} : vector<2x6x8xf32>, vector<2x8x32xf32>, vector<2x6x32xf32> -> vector<2x6x32xf32>
    "tpu.trace_stop"() : () -> ()
    %295 = vector.shape_cast %294 : vector<2x6x32xf32> to vector<12x32xf32>
    %c0_96 = arith.constant 0 : index
    %c0_97 = arith.constant 0 : index
    %296 = vector.load %arg11[%c0_96, %c0_97] : memref<32x128xf32, #tpu.memory_space<vmem>>, vector<32x128xf32>
    %cst_98 = arith.constant dense<0.000000e+00> : vector<12x128xf32>
    %297 = tpu.matmul %295, %296, %cst_98 {dimension_numbers = #tpu.dot_dimension_numbers<[1], [0], [0], [1], [0, 0, 1, 1], [], []>} : vector<12x32xf32>, vector<32x128xf32>, vector<12x128xf32> -> vector<12x128xf32>
    %298 = vector.shape_cast %266 : vector<2x6x128xf32> to vector<12x128xf32>
    %c0_99 = arith.constant 0 : index
    %c0_100 = arith.constant 0 : index
    %299 = vector.load %arg12[%c0_99, %c0_100] : memref<128x128xf32, #tpu.memory_space<vmem>>, vector<128x128xf32>
    %cst_101 = arith.constant dense<0.000000e+00> : vector<12x128xf32>
    %300 = tpu.matmul %298, %299, %cst_101 {dimension_numbers = #tpu.dot_dimension_numbers<[1], [0], [0], [1], [0, 0, 1, 1], [], []>} : vector<12x128xf32>, vector<128x128xf32>, vector<12x128xf32> -> vector<12x128xf32>
    %301 = arith.addf %297, %300 : vector<12x128xf32>
    %c0_102 = arith.constant 0 : index
    %c0_103 = arith.constant 0 : index
    %302 = vector.load %arg13[%c0_102, %c0_103] : memref<1x128xf32, #tpu.memory_space<vmem>>, vector<1x128xf32>
    %303 = vector.broadcast %302 : vector<1x128xf32> to vector<12x128xf32>
    %304 = arith.addf %301, %303 : vector<12x128xf32>
    %305 = math.tanh %304 : vector<12x128xf32>
    %c0_104 = arith.constant 0 : index
    %c0_105 = arith.constant 0 : index
    %306 = vector.load %arg14[%c0_104, %c0_105] : memref<128x128xf32, #tpu.memory_space<vmem>>, vector<128x128xf32>
    %cst_106 = arith.constant dense<0.000000e+00> : vector<12x128xf32>
    %307 = tpu.matmul %305, %306, %cst_106 {dimension_numbers = #tpu.dot_dimension_numbers<[1], [0], [0], [1], [0, 0, 1, 1], [], []>} : vector<12x128xf32>, vector<128x128xf32>, vector<12x128xf32> -> vector<12x128xf32>
    %c0_107 = arith.constant 0 : index
    %c0_108 = arith.constant 0 : index
    %308 = vector.load %arg15[%c0_107, %c0_108] : memref<1x128xf32, #tpu.memory_space<vmem>>, vector<1x128xf32>
    %309 = vector.broadcast %308 : vector<1x128xf32> to vector<12x128xf32>
    %310 = arith.addf %307, %309 : vector<12x128xf32>
    %cst_109 = arith.constant dense<0xFF800000> : vector<12xf32>
    %311 = vector.multi_reduction <maximumf>, %310, %cst_109 [1] : vector<12x128xf32> to vector<12xf32>
    %312 = vector.shape_cast %311 : vector<12xf32> to vector<12x1xf32>
    %313 = vector.broadcast %312 : vector<12x1xf32> to vector<12x128xf32>
    %314 = arith.subf %310, %313 : vector<12x128xf32>
    %315 = math.exp %314 : vector<12x128xf32>
    %cst_110 = arith.constant dense<0.000000e+00> : vector<12xf32>
    %316 = vector.multi_reduction <add>, %315, %cst_110 [1] : vector<12x128xf32> to vector<12xf32>
    %317 = vector.shape_cast %316 : vector<12xf32> to vector<12x1xf32>
    %318 = math.log %317 : vector<12x1xf32>
    %319 = arith.addf %318, %312 : vector<12x1xf32>
    %320 = vector.broadcast %319 : vector<12x1xf32> to vector<12x128xf32>
    %321 = arith.subf %310, %320 : vector<12x128xf32>
    %322 = vector.shape_cast %321 : vector<12x128xf32> to vector<2x6x128xf32>
    %c0_111 = arith.constant 0 : index
    %c0_112 = arith.constant 0 : index
    %c0_113 = arith.constant 0 : index
    %323 = vector.load %arg16[%c0_111, %c0_112, %c0_113] : memref<2x6x128xf32, #tpu.memory_space<vmem>>, vector<2x6x128xf32>
    tpu.vector_store %arg16[%c0_111, %c0_112, %c0_113], %322 {strides = array<i32>} : memref<2x6x128xf32, #tpu.memory_space<vmem>>, vector<2x6x128xf32>,
    return
  }
  func.func @transform_0(%arg0: i32) -> (i32, i32) {
    %c0_i32 = arith.constant 0 : i32
    %c0_i32_0 = arith.constant 0 : i32
    return %arg0, %c0_i32 : i32, i32
  }
  func.func @transform_1(%arg0: i32) -> (i32, i32) {
    %c0_i32 = arith.constant 0 : i32
    %c0_i32_0 = arith.constant 0 : i32
    return %arg0, %c0_i32 : i32, i32
  }
  func.func @transform_2(%arg0: i32) -> (i32, i32, i32) {
    %c0_i32 = arith.constant 0 : i32
    %c0_i32_0 = arith.constant 0 : i32
    %c0_i32_1 = arith.constant 0 : i32
    return %c0_i32, %arg0, %c0_i32_0 : i32, i32, i32
  }
  func.func @transform_3(%arg0: i32) -> (i32, i32) {
    %c0_i32 = arith.constant 0 : i32
    %c0_i32_0 = arith.constant 0 : i32
    return %arg0, %c0_i32 : i32, i32
  }
  func.func @transform_4(%arg0: i32) -> (i32, i32) {
    %c0_i32 = arith.constant 0 : i32
    %c0_i32_0 = arith.constant 0 : i32
    %c0_i32_1 = arith.constant 0 : i32
    return %c0_i32, %c0_i32_0 : i32, i32
  }
  func.func @transform_5(%arg0: i32) -> (i32, i32) {
    %c0_i32 = arith.constant 0 : i32
    %c0_i32_0 = arith.constant 0 : i32
    %c0_i32_1 = arith.constant 0 : i32
    return %c0_i32, %c0_i32_0 : i32, i32
  }
  func.func @transform_6(%arg0: i32) -> (i32, i32) {
    %c0_i32 = arith.constant 0 : i32
    %c0_i32_0 = arith.constant 0 : i32
    %c0_i32_1 = arith.constant 0 : i32
    return %c0_i32, %c0_i32_0 : i32, i32
  }
  func.func @transform_7(%arg0: i32) -> (i32, i32) {
    %c0_i32 = arith.constant 0 : i32
    %c0_i32_0 = arith.constant 0 : i32
    %c0_i32_1 = arith.constant 0 : i32
    return %c0_i32, %c0_i32_0 : i32, i32
  }
  func.func @transform_8(%arg0: i32) -> (i32, i32, i32) {
    %c0_i32 = arith.constant 0 : i32
    %c0_i32_0 = arith.constant 0 : i32
    %c0_i32_1 = arith.constant 0 : i32
    return %arg0, %c0_i32, %c0_i32_0 : i32, i32, i32
  }
  func.func @transform_9(%arg0: i32) -> (i32, i32) {
    %c0_i32 = arith.constant 0 : i32
    %c0_i32_0 = arith.constant 0 : i32
    %c0_i32_1 = arith.constant 0 : i32
    return %c0_i32, %c0_i32_0 : i32, i32
  }
  func.func @transform_10(%arg0: i32) -> (i32, i32) {
    %c0_i32 = arith.constant 0 : i32
    %c0_i32_0 = arith.constant 0 : i32
    %c0_i32_1 = arith.constant 0 : i32
    return %c0_i32, %c0_i32_0 : i32, i32
  }
  func.func @transform_11(%arg0: i32) -> (i32, i32) {
    %c0_i32 = arith.constant 0 : i32
    %c0_i32_0 = arith.constant 0 : i32
    %c0_i32_1 = arith.constant 0 : i32
    return %c0_i32, %c0_i32_0 : i32, i32
  }
  func.func @transform_12(%arg0: i32) -> (i32, i32) {
    %c0_i32 = arith.constant 0 : i32
    %c0_i32_0 = arith.constant 0 : i32
    %c0_i32_1 = arith.constant 0 : i32
    return %c0_i32, %c0_i32_0 : i32, i32
  }
  func.func @transform_13(%arg0: i32) -> (i32, i32) {
    %c0_i32 = arith.constant 0 : i32
    %c0_i32_0 = arith.constant 0 : i32
    %c0_i32_1 = arith.constant 0 : i32
    return %c0_i32, %c0_i32_0 : i32, i32
  }
  func.func @transform_14(%arg0: i32) -> (i32, i32) {
    %c0_i32 = arith.constant 0 : i32
    %c0_i32_0 = arith.constant 0 : i32
    %c0_i32_1 = arith.constant 0 : i32
    return %c0_i32, %c0_i32_0 : i32, i32
  }
  func.func @transform_15(%arg0: i32) -> (i32, i32, i32) {
    %c0_i32 = arith.constant 0 : i32
    %c0_i32_0 = arith.constant 0 : i32
    %c0_i32_1 = arith.constant 0 : i32
    return %arg0, %c0_i32, %c0_i32_0 : i32, i32, i32
  }
  func.func @transform_16(%arg0: i32) -> (i32, i32) {
    %c0_i32 = arith.constant 0 : i32
    %c0_i32_0 = arith.constant 0 : i32
    return %arg0, %c0_i32 : i32, i32
  }
}

</mosaic_0001>

<llo_original>
// kernel: decoder_forward.1
$region0: #{decoder_forward.1}
  #allocation0 [shape = 'u32[]', space=smem, size = 0x4, offset = 0x4, fixed_abs, tag = 'smem constant byte address 0x4 - core index']
  #allocation1 [shape = 'u32[72,128]{1,0:T(1,128)}', space=vmem, size = 0x9000, scoped, tag = 'internal scratch']
  #allocation2 [shape = 'f32[6,2,384]{2,1,0:T(2,128)}', space=vmem, size = 0x4800, scoped, tag = 'scratch operand']
  #allocation3 [shape = 'f32[2,6,128]{2,1,0:T(8,128)}', space=vmem, size = 0x2000, scoped, tag = 'scratch operand']
  %s0 = inlined_call_operand.vmem [shape: s32[2,1], index: 0, kind: input, shape index: {}]
  %s1 = inlined_call_operand.vmem [shape: s32[2,1], index: 1, kind: input, shape index: {}]
  %s2 = inlined_call_operand.vmem [shape: f32[6,2,16], index: 2, kind: input, shape index: {}]
  %s3 = inlined_call_operand.vmem [shape: f32[2,128], index: 3, kind: input, shape index: {}]
  %s4 = inlined_call_operand.vmem [shape: f32[16,384], index: 4, kind: input, shape index: {}]
  %s5 = inlined_call_operand.vmem [shape: f32[1,384], index: 5, kind: input, shape index: {}]
  %s6 = inlined_call_operand.hbm [shape: f32[128,384], index: 6, kind: input, shape index: {}]
  %s7 = inlined_call_operand.vmem [shape: f32[1,384], index: 7, kind: input, shape index: {}]
  %s8 = inlined_call_operand.hbm [shape: f32[2,8,32], index: 8, kind: input, shape index: {}]
  %s9 = inlined_call_operand.vmem [shape: f32[32,128], index: 9, kind: input, shape index: {}]
  %s10 = inlined_call_operand.vmem [shape: f32[32,128], index: 10, kind: input, shape index: {}]
  %s11 = inlined_call_operand.vmem [shape: f32[128,128], index: 11, kind: input, shape index: {}]
  %s12 = inlined_call_operand.vmem [shape: f32[1,128], index: 12, kind: input, shape index: {}]
  %s13 = inlined_call_operand.hbm [shape: f32[128,128], index: 13, kind: input, shape index: {}]
  %s14 = inlined_call_operand.vmem [shape: f32[1,128], index: 14, kind: input, shape index: {}]
  %s15 = inlined_call_operand.vmem [shape: f32[2,6,128], index: 15, kind: output, shape index: {0}]
  %s16 = inlined_call_operand.vmem [shape: f32[2,128], index: 16, kind: output, shape index: {1}]
  %17 = xla_tuple %s15, %s16
  %s18 = sld [smem:[#allocation0]]
  $region90: #{decoder_forward.1} parent=0
    _
  %s20 = ssub.s32 1, %s18
  %s21 = scalar_select 0, %s20, %s18
  $region1: #{decoder_forward.1} parent=0
    #allocation4 [shape = 'u8[196608]{0}', space=vmem, size = 0x30000, scoped, tag = 'input window, operand 6, single buffered']
    #allocation5 [shape = 's32[1]{0}', space=sflag, size = 0x4, scoped, tag = 'scoped memory for decoder_forward.1']
    #allocation6 [shape = 'u8[8192]{0}', space=vmem, size = 0x2000, scoped, tag = 'input window, operand 8, single buffered']
    #allocation7 [shape = 's32[1]{0}', space=sflag, size = 0x4, scoped, tag = 'scoped memory for decoder_forward.1']
    #allocation8 [shape = 'u8[65536]{0}', space=vmem, size = 0x10000, scoped, tag = 'input window, operand 13, single buffered']
    %22 = vsyncpa [#allocation5], 0
    %23 = vsyncpa [#allocation7], 0
    // Predicated region
    $region2: #{decoder_forward.1} parent=1 // pred_check
      _
    $region3: #{decoder_forward.1} parent=1 // pred_check_branch
      %25 = sbr.rel (0) target = $region5
    $region4: #{decoder_forward.1} parent=1 // pred_region
      _
    $region5: #{decoder_forward.1} parent=1 // pred_fallthru
      _
    // Predicated region
    $region6: #{decoder_forward.1} parent=1 // pred_check
      _
    $region7: #{decoder_forward.1} parent=1 // pred_check_branch
      %27 = sbr.rel (0) target = $region9
    $region8: #{decoder_forward.1} parent=1 // pred_region
      _
    $region9: #{decoder_forward.1} parent=1 // pred_fallthru
      _
    // Predicated region
    $region10: #{decoder_forward.1} parent=1 // pred_check
      _
    $region11: #{decoder_forward.1} parent=1 // pred_check_branch
      %29 = sbr.rel (0) target = $region13
    $region12: #{decoder_forward.1} parent=1 // pred_region
      _
    $region13: #{decoder_forward.1} parent=1 // pred_fallthru
      _
    // Predicated region
    $region14: #{decoder_forward.1} parent=1 // pred_check
      _
    $region15: #{decoder_forward.1} parent=1 // pred_check_branch
      %31 = sbr.rel (0) target = $region17
    $region16: #{decoder_forward.1} parent=1 // pred_region
      _
    $region17: #{decoder_forward.1} parent=1 // pred_fallthru
      _
    // Predicated region
    $region18: #{decoder_forward.1} parent=1 // pred_check
      _
    $region19: #{decoder_forward.1} parent=1 // pred_check_branch
      %33 = sbr.rel (0) target = $region21
    $region20: #{decoder_forward.1} parent=1 // pred_region
      _
    $region21: #{decoder_forward.1} parent=1 // pred_fallthru
      _
    // Predicated region
    $region22: #{decoder_forward.1} parent=1 // pred_check
      _
    $region23: #{decoder_forward.1} parent=1 // pred_check_branch
      %35 = sbr.rel (0) target = $region25
    $region24: #{decoder_forward.1} parent=1 // pred_region
      _
    $region25: #{decoder_forward.1} parent=1 // pred_fallthru
      _
    // Predicated region
    $region26: #{decoder_forward.1} parent=1 // pred_check
      _
    $region27: #{decoder_forward.1} parent=1 // pred_check_branch
      %37 = sbr.rel (0) target = $region29
    $region28: #{decoder_forward.1} parent=1 // pred_region
      %39 = vsyncadd [#allocation5], 0
      %s40 = sshll.u32 %s6, 4
      %s41 = int_to_ptr.hbm [resolvable:$true] %s40
      %s42 = sshll.u32 [#allocation4], 4
      %s43 = int_to_ptr.vmem [resolvable:$true] %s42
      %48 = dma.hbm_to_vmem [thread:$0]  %s41, 6144, %s43, [#allocation5], 384, 384, 24
    $region29: #{decoder_forward.1} parent=1 // pred_fallthru
      _
    // Predicated region
    $region30: #{decoder_forward.1} parent=1 // pred_check
      _
    $region31: #{decoder_forward.1} parent=1 // pred_check_branch
      %50 = sbr.rel (0) target = $region33
    $region32: #{decoder_forward.1} parent=1 // pred_region
      _
    $region33: #{decoder_forward.1} parent=1 // pred_fallthru
      _
    // Predicated region
    $region34: #{decoder_forward.1} parent=1 // pred_check
      _
    $region35: #{decoder_forward.1} parent=1 // pred_check_branch
      %52 = sbr.rel (0) target = $region37
    $region36: #{decoder_forward.1} parent=1 // pred_region
      %54 = vsyncadd [#allocation7], 0
      %s55 = sshll.u32 %s8, 4
      %s56 = int_to_ptr.hbm [resolvable:$true] %s55
      %s57 = sshll.u32 [#allocation6], 4
      %s58 = int_to_ptr.vmem [resolvable:$true] %s57
      %63 = dma.hbm_to_vmem [thread:$0]  %s56, 256, %s58, [#allocation7], 128, 128, 8
    $region37: #{decoder_forward.1} parent=1 // pred_fallthru
      _
    // Predicated region
    $region38: #{decoder_forward.1} parent=1 // pred_check
      _
    $region39: #{decoder_forward.1} parent=1 // pred_check_branch
      %65 = sbr.rel (0) target = $region41
    $region40: #{decoder_forward.1} parent=1 // pred_region
      _
    $region41: #{decoder_forward.1} parent=1 // pred_fallthru
      _
    // Predicated region
    $region42: #{decoder_forward.1} parent=1 // pred_check
      _
    $region43: #{decoder_forward.1} parent=1 // pred_check_branch
      %67 = sbr.rel (0) target = $region45
    $region44: #{decoder_forward.1} parent=1 // pred_region
      _
    $region45: #{decoder_forward.1} parent=1 // pred_fallthru
      _
    // Predicated region
    $region46: #{decoder_forward.1} parent=1 // pred_check
      _
    $region47: #{decoder_forward.1} parent=1 // pred_check_branch
      %69 = sbr.rel (0) target = $region49
    $region48: #{decoder_forward.1} parent=1 // pred_region
      _
    $region49: #{decoder_forward.1} parent=1 // pred_fallthru
      _
    // Predicated region
    $region50: #{decoder_forward.1} parent=1 // pred_check
      _
    $region51: #{decoder_forward.1} parent=1 // pred_check_branch
      %71 = sbr.rel (0) target = $region53
    $region52: #{decoder_forward.1} parent=1 // pred_region
      _
    $region53: #{decoder_forward.1} parent=1 // pred_fallthru
      _
    // Predicated region
    $region54: #{decoder_forward.1} parent=1 // pred_check
      _
    $region55: #{decoder_forward.1} parent=1 // pred_check_branch
      %73 = sbr.rel (0) target = $region57
    $region56: #{decoder_forward.1} parent=1 // pred_region
      %75 = vsyncadd [#allocation7], 0
      %s76 = sshll.u32 %s13, 4
      %s77 = int_to_ptr.hbm [resolvable:$true] %s76
      %s78 = sshll.u32 [#allocation8], 4
      %s79 = int_to_ptr.vmem [resolvable:$true] %s78
      %84 = dma.hbm_to_vmem [thread:$0]  %s77, 2048, %s79, [#allocation7], 128, 128, 8
    $region57: #{decoder_forward.1} parent=1 // pred_fallthru
      _
    // Predicated region
    $region58: #{decoder_forward.1} parent=1 // pred_check
      _
    $region59: #{decoder_forward.1} parent=1 // pred_check_branch
      %86 = sbr.rel (0) target = $region61
    $region60: #{decoder_forward.1} parent=1 // pred_region
      _
    $region61: #{decoder_forward.1} parent=1 // pred_fallthru
      _
    // Predicated region
    $region62: #{decoder_forward.1} parent=1 // pred_check
      _
    $region63: #{decoder_forward.1} parent=1 // pred_check_branch
      %88 = sbr.rel (0) target = $region65
    $region64: #{decoder_forward.1} parent=1 // pred_region
      %90 = dma.done [#allocation5], 6144
    $region65: #{decoder_forward.1} parent=1 // pred_fallthru
      _
    // Predicated region
    $region66: #{decoder_forward.1} parent=1 // pred_check
      _
    $region67: #{decoder_forward.1} parent=1 // pred_check_branch
      %92 = sbr.rel (0) target = $region69
    $region68: #{decoder_forward.1} parent=1 // pred_region
      %94 = dma.done [#allocation7], 256
    $region69: #{decoder_forward.1} parent=1 // pred_fallthru
      _
    // Predicated region
    $region70: #{decoder_forward.1} parent=1 // pred_check
      _
    $region71: #{decoder_forward.1} parent=1 // pred_check_branch
      %96 = sbr.rel (0) target = $region73
    $region72: #{decoder_forward.1} parent=1 // pred_region
      %98 = dma.done [#allocation7], 2048
    $region73: #{decoder_forward.1} parent=1 // pred_fallthru
      _
    %v99 = vld [vmem:[%s2] sm:$0x3]
    %v100 = vld [vmem:[%s2 + $0x2] sm:$0x3]
    %v101 = vld [vmem:[%s2 + $0x4] sm:$0x3]
    %v102 = vld [vmem:[%s2 + $0x6] sm:$0x3]
    %v103 = vld [vmem:[%s2 + $0x8] sm:$0x3]
    %v104 = vld [vmem:[%s2 + $0xa] sm:$0x3]
    %v105 = vld [vmem:[%s4] sm:$0xff]
    %v106 = vld [vmem:[%s4 + $0x8] sm:$0xff]
    %v107 = vld [vmem:[%s4 + $0x10] sm:$0xff]
    %v108 = vld [vmem:[%s4 + $0x18] sm:$0xff]
    %v109 = vld [vmem:[%s4 + $0x20] sm:$0xff]
    %v110 = vld [vmem:[%s4 + $0x28] sm:$0xff]
    %v111 = vld [vmem:[%s5] sm:$0x7]
    %v113 = vperm.slane %v111, 0
    %v114 = vperm.slane %v111, 1
    %v115 = vperm.slane %v111, 2
    %125 = vst [vmem:[#allocation1] ss:$4 sm:$0xff] %v99
    %s126 = scalar_lea.vmem [#allocation1], 1
    %127 = vst [vmem:[%s126] ss:$4 sm:$0xff] %v100
    %s128 = scalar_lea.vmem [#allocation1], 2
    %129 = vst [vmem:[%s128] ss:$4 sm:$0xff] %v101
    %s130 = scalar_lea.vmem [#allocation1], 3
    %131 = vst [vmem:[%s130] ss:$4 sm:$0xff] %v102
    %s132 = scalar_lea.vmem [#allocation1], 32
    %133 = vst [vmem:[%s132] ss:$4 sm:$0xff] %v103
    %s134 = scalar_lea.vmem [#allocation1], 33
    %135 = vst [vmem:[%s134] ss:$4 sm:$0xff] %v104
    %v136 = vld.sshfl [vmem:[#allocation1] sm:$0xff pattern:$0x73625140]
    %v137 = vld.sshfl [vmem:[#allocation1 + $0x20] sm:$0xff pattern:$0x73625140]
    %vm138 = vcmask 130048
    %v139 = vsel %vm138, %v136, 0
    %v141 = vsel %vm138, %v137, 0
    %143 = vmatpush.msra.mxu0 0.0
    %144 = vmatpush.msra.mxu0 0.0
    %145 = vmatpush.msra.mxu0 0.0
    %146 = vmatpush.msra.mxu0 0.0
    %147 = vmatpush.msra.mxu0 0.0
    %148 = vmatpush.msra.mxu0 0.0
    %149 = vmatpush.msra.mxu0 0.0
    %150 = vmatpush.msra.mxu0 0.0
    %151 = vmatpush.msra.mxu0 0.0
    %152 = vmatpush.msra.mxu0 0.0
    %153 = vmatpush.msra.mxu0 0.0
    %154 = vmatpush.msra.mxu0 0.0
    %155 = vmatpush.msra.mxu0 0.0
    %156 = vmatpush.msra.mxu0 0.0
    %157 = vmatpush.msra.mxu0 %v108
    %158 = vmatpush.msra.mxu0 %v105
    %159 = vmatmul.f32.gmra.mxu0 %v139
    %v160 = vpop.f32.mrf.mxu0
    %v161 = vadd.f32 %v113, %v160
    %162 = vmatmul.f32.gmra.mxu0 %v141
    %v163 = vpop.f32.mrf.mxu0
    %v164 = vadd.f32 %v113, %v163
    %165 = vdwg.mxu0
    %166 = vmatpush.msra.mxu0 0.0
    %167 = vmatpush.msra.mxu0 0.0
    %168 = vmatpush.msra.mxu0 0.0
    %169 = vmatpush.msra.mxu0 0.0
    %170 = vmatpush.msra.mxu0 0.0
    %171 = vmatpush.msra.mxu0 0.0
    %172 = vmatpush.msra.mxu0 0.0
    %173 = vmatpush.msra.mxu0 0.0
    %174 = vmatpush.msra.mxu0 0.0
    %175 = vmatpush.msra.mxu0 0.0
    %176 = vmatpush.msra.mxu0 0.0
    %177 = vmatpush.msra.mxu0 0.0
    %178 = vmatpush.msra.mxu0 0.0
    %179 = vmatpush.msra.mxu0 0.0
    %180 = vmatpush.msra.mxu0 %v109
    %181 = vmatpush.msra.mxu0 %v106
    %182 = vmatmul.f32.gmra.mxu0 %v139
    %v183 = vpop.f32.mrf.mxu0
    %v184 = vadd.f32 %v114, %v183
    %185 = vmatmul.f32.gmra.mxu0 %v141
    %v186 = vpop.f32.mrf.mxu0
    %v187 = vadd.f32 %v114, %v186
    %188 = vdwg.mxu0
    %189 = vmatpush.msra.mxu0 0.0
    %190 = vmatpush.msra.mxu0 0.0
    %191 = vmatpush.msra.mxu0 0.0
    %192 = vmatpush.msra.mxu0 0.0
    %193 = vmatpush.msra.mxu0 0.0
    %194 = vmatpush.msra.mxu0 0.0
    %195 = vmatpush.msra.mxu0 0.0
    %196 = vmatpush.msra.mxu0 0.0
    %197 = vmatpush.msra.mxu0 0.0
    %198 = vmatpush.msra.mxu0 0.0
    %199 = vmatpush.msra.mxu0 0.0
    %200 = vmatpush.msra.mxu0 0.0
    %201 = vmatpush.msra.mxu0 0.0
    %202 = vmatpush.msra.mxu0 0.0
    %203 = vmatpush.msra.mxu0 %v110
    %204 = vmatpush.msra.mxu0 %v107
    %205 = vmatmul.f32.gmra.mxu0 %v139
    %v206 = vpop.f32.mrf.mxu0
    %v207 = vadd.f32 %v115, %v206
    %208 = vmatmul.f32.gmra.mxu0 %v141
    %v209 = vpop.f32.mrf.mxu0
    %v210 = vadd.f32 %v115, %v209
    %211 = vdwg.mxu0
    %v218 = vrot.slane %v184, 6
    %v219 = vrot.slane %v207, 4
    %v220 = vrot.slane %v187, 6
    %v221 = vrot.slane %v210, 4
    %vm222 = vcmask 1041408
    %v223 = vsel %vm222, %v161, %v218
    %vm224 = vcmask 1043456
    %v225 = vsel %vm224, %v223, %v219
    %vm226 = vcmask 1043458
    %v227 = vsel %vm226, %v161, %v218
    %vm228 = vcmask 1045506
    %v229 = vsel %vm228, %v227, %v219
    %v230 = vrot.slane %v229, 2
    %vm231 = vcmask 1045508
    %v232 = vsel %vm231, %v161, %v218
    %v233 = vsel %vm224, %v219, %v232
    %v234 = vrot.slane %v233, 4
    %vm235 = vcmask 1045504
    %v236 = vsel %vm235, %v218, %v161
    %v237 = vsel %vm228, %v219, %v236
    %v238 = vrot.slane %v237, 6
    %v239 = vsel %vm222, %v164, %v220
    %v240 = vsel %vm224, %v239, %v221
    %v241 = vsel %vm226, %v164, %v220
    %v242 = vsel %vm228, %v241, %v221
    %v243 = vrot.slane %v242, 2
    %250 = vst [vmem:[#allocation2] sm:$0x3f] %v225
    %251 = vst [vmem:[#allocation2 + $0x6] sm:$0x3f] %v230
    %252 = vst [vmem:[#allocation2 + $0xc] sm:$0x3f] %v234
    %253 = vst [vmem:[#allocation2 + $0x12] sm:$0x3f] %v238
    %254 = vst [vmem:[#allocation2 + $0x18] sm:$0x3f] %v240
    %255 = vst [vmem:[#allocation2 + $0x1e] sm:$0x3f] %v243
    %v256 = vld [vmem:[#allocation4] sm:$0xff]
    %v257 = vld [vmem:[#allocation4 + $0x8] sm:$0xff]
    %v258 = vld [vmem:[#allocation4 + $0x10] sm:$0xff]
    %v259 = vld [vmem:[#allocation4 + $0x18] sm:$0xff]
    %v260 = vld [vmem:[#allocation4 + $0x20] sm:$0xff]
    %v261 = vld [vmem:[#allocation4 + $0x28] sm:$0xff]
    %v262 = vld [vmem:[#allocation4 + $0x30] sm:$0xff]
    %v263 = vld [vmem:[#allocation4 + $0x38] sm:$0xff]
    %v264 = vld [vmem:[#allocation4 + $0x40] sm:$0xff]
    %v265 = vld [vmem:[#allocation4 + $0x48] sm:$0xff]
    %v266 = vld [vmem:[#allocation4 + $0x50] sm:$0xff]
    %v267 = vld [vmem:[#allocation4 + $0x58] sm:$0xff]
    %v268 = vld [vmem:[#allocation4 + $0x60] sm:$0xff]
    %v269 = vld [vmem:[#allocation4 + $0x68] sm:$0xff]
    %v270 = vld [vmem:[#allocation4 + $0x70] sm:$0xff]
    %v271 = vld [vmem:[#allocation4 + $0x78] sm:$0xff]
    %v272 = vld [vmem:[#allocation4 + $0x80] sm:$0xff]
    %v273 = vld [vmem:[#allocation4 + $0x88] sm:$0xff]
    %v274 = vld [vmem:[#allocation4 + $0x90] sm:$0xff]
    %v275 = vld [vmem:[#allocation4 + $0x98] sm:$0xff]
    %v276 = vld [vmem:[#allocation4 + $0xa0] sm:$0xff]
    %v277 = vld [vmem:[#allocation4 + $0xa8] sm:$0xff]
    %v278 = vld [vmem:[#allocation4 + $0xb0] sm:$0xff]
    %v279 = vld [vmem:[#allocation4 + $0xb8] sm:$0xff]
    %v280 = vld [vmem:[#allocation4 + $0xc0] sm:$0xff]
    %v281 = vld [vmem:[#allocation4 + $0xc8] sm:$0xff]
    %v282 = vld [vmem:[#allocation4 + $0xd0] sm:$0xff]
    %v283 = vld [vmem:[#allocation4 + $0xd8] sm:$0xff]
    %v284 = vld [vmem:[#allocation4 + $0xe0] sm:$0xff]
    %v285 = vld [vmem:[#allocation4 + $0xe8] sm:$0xff]
    %v286 = vld [vmem:[#allocation4 + $0xf0] sm:$0xff]
    %v287 = vld [vmem:[#allocation4 + $0xf8] sm:$0xff]
    %v288 = vld [vmem:[#allocation4 + $0x100] sm:$0xff]
    %v289 = vld [vmem:[#allocation4 + $0x108] sm:$0xff]
    %v290 = vld [vmem:[#allocation4 + $0x110] sm:$0xff]
    %v291 = vld [vmem:[#allocation4 + $0x118] sm:$0xff]
    %v292 = vld [vmem:[#allocation4 + $0x120] sm:$0xff]
    %v293 = vld [vmem:[#allocation4 + $0x128] sm:$0xff]
    %v294 = vld [vmem:[#allocation4 + $0x130] sm:$0xff]
    %v295 = vld [vmem:[#allocation4 + $0x138] sm:$0xff]
    %v296 = vld [vmem:[#allocation4 + $0x140] sm:$0xff]
    %v297 = vld [vmem:[#allocation4 + $0x148] sm:$0xff]
    %v298 = vld [vmem:[#allocation4 + $0x150] sm:$0xff]
    %v299 = vld [vmem:[#allocation4 + $0x158] sm:$0xff]
    %v300 = vld [vmem:[#allocation4 + $0x160] sm:$0xff]
    %v301 = vld [vmem:[#allocation4 + $0x168] sm:$0xff]
    %v302 = vld [vmem:[#allocation4 + $0x170] sm:$0xff]
    %v303 = vld [vmem:[#allocation4 + $0x178] sm:$0xff]
    %v304 = vld [vmem:[%s7] sm:$0x7]
    %v305 = vld [vmem:[%s1] sm:$0x3]
    %v306 = vld [vmem:[%s3] sm:$0x3]
    %v307 = vld [vmem:[#allocation2] sm:$0x3f]
    %v309 = vperm.slane %v304, 0
    %v310 = vperm.slane %v304, 1
    %v311 = vperm.slane %v304, 2
    %315 = vmatpush.msra.mxu0 %v301
    %316 = vmatpush.msra.mxu0 %v298
    %317 = vmatpush.msra.mxu0 %v295
    %318 = vmatpush.msra.mxu0 %v292
    %319 = vmatpush.msra.mxu0 %v289
    %320 = vmatpush.msra.mxu0 %v286
    %321 = vmatpush.msra.mxu0 %v283
    %322 = vmatpush.msra.mxu0 %v280
    %323 = vmatpush.msra.mxu0 %v277
    %324 = vmatpush.msra.mxu0 %v274
    %325 = vmatpush.msra.mxu0 %v271
    %326 = vmatpush.msra.mxu0 %v268
    %327 = vmatpush.msra.mxu0 %v265
    %328 = vmatpush.msra.mxu0 %v262
    %329 = vmatpush.msra.mxu0 %v259
    %330 = vmatpush.msra.mxu0 %v256
    %331 = vmatmul.f32.gmra.mxu0 %v306
    %v332 = vpop.f32.mrf.mxu0
    %v333 = vadd.f32 %v309, %v332
    %334 = vdwg.mxu0
    %335 = vmatpush.msra.mxu0 %v302
    %336 = vmatpush.msra.mxu0 %v299
    %337 = vmatpush.msra.mxu0 %v296
    %338 = vmatpush.msra.mxu0 %v293
    %339 = vmatpush.msra.mxu0 %v290
    %340 = vmatpush.msra.mxu0 %v287
    %341 = vmatpush.msra.mxu0 %v284
    %342 = vmatpush.msra.mxu0 %v281
    %343 = vmatpush.msra.mxu0 %v278
    %344 = vmatpush.msra.mxu0 %v275
    %345 = vmatpush.msra.mxu0 %v272
    %346 = vmatpush.msra.mxu0 %v269
    %347 = vmatpush.msra.mxu0 %v266
    %348 = vmatpush.msra.mxu0 %v263
    %349 = vmatpush.msra.mxu0 %v260
    %350 = vmatpush.msra.mxu0 %v257
    %351 = vmatmul.f32.gmra.mxu0 %v306
    %v352 = vpop.f32.mrf.mxu0
    %v353 = vadd.f32 %v310, %v352
    %354 = vdwg.mxu0
    %355 = vmatpush.msra.mxu0 %v303
    %356 = vmatpush.msra.mxu0 %v300
    %357 = vmatpush.msra.mxu0 %v297
    %358 = vmatpush.msra.mxu0 %v294
    %359 = vmatpush.msra.mxu0 %v291
    %360 = vmatpush.msra.mxu0 %v288
    %361 = vmatpush.msra.mxu0 %v285
    %362 = vmatpush.msra.mxu0 %v282
    %363 = vmatpush.msra.mxu0 %v279
    %364 = vmatpush.msra.mxu0 %v276
    %365 = vmatpush.msra.mxu0 %v273
    %366 = vmatpush.msra.mxu0 %v270
    %367 = vmatpush.msra.mxu0 %v267
    %368 = vmatpush.msra.mxu0 %v264
    %369 = vmatpush.msra.mxu0 %v261
    %370 = vmatpush.msra.mxu0 %v258
    %371 = vmatmul.f32.gmra.mxu0 %v306
    %v372 = vpop.f32.mrf.mxu0
    %v373 = vadd.f32 %v311, %v372
    %374 = vdwg.mxu0
    %v375 = vadd.f32 %v307, %v333
    %v376 = vxor.u32 %v375, 2147483648
    %v377 = vmul.f32 %v376, 1.442695
    %v378 = vpow.pop %v377
    %v379 = vadd.f32 %v378, 1.0
    %v380 = vrcp.pop %v379
    %v381 = vmul.f32 %v379, %v380
    %v382 = vsub.f32 1.0, %v381
    %v383 = vmul.f32 %v380, %v382
    %v384 = vadd.f32 %v380, %v383
    %vm385 = vweird.f32 %v379
    %vm386 = vweird.f32 %v380
    %vm387 = vmor %vm385, %vm386
    %v388 = vsel %vm387, %v380, %v384
    %v389 = vand.u32 2147483647, %v379
    %vm390 = vcmp.eq.f32.partialorder %v389, 8.507059e+37
    %v391 = vand.u32 %v379, 2147483648
    %v392 = vor.u32 1.1754944e-38, %v391
    %v393 = vsel %vm390, %v392, %v388
    %v394 = vmul.f32 1.0, %v393
    %v396 = vrot.slane %v307, 2
    %v398 = vadd.f32 %v396, %v353
    %v399 = vxor.u32 %v398, 2147483648
    %v400 = vmul.f32 %v399, 1.442695
    %v401 = vpow.pop %v400
    %v402 = vadd.f32 %v401, 1.0
    %v403 = vrcp.pop %v402
    %v404 = vmul.f32 %v402, %v403
    %v405 = vsub.f32 1.0, %v404
    %v406 = vmul.f32 %v403, %v405
    %v407 = vadd.f32 %v403, %v406
    %vm408 = vweird.f32 %v402
    %vm409 = vweird.f32 %v403
    %vm410 = vmor %vm408, %vm409
    %v411 = vsel %vm410, %v403, %v407
    %v412 = vand.u32 2147483647, %v402
    %vm413 = vcmp.eq.f32.partialorder %v412, 8.507059e+37
    %v414 = vand.u32 %v402, 2147483648
    %v415 = vor.u32 1.1754944e-38, %v414
    %v416 = vsel %vm413, %v415, %v411
    %v417 = vmul.f32 1.0, %v416
    %v418 = vmul.f32 %v394, %v373
    %v419 = vrot.slane %v307, 4
    %v421 = vadd.f32 %v419, %v418
    %v422 = vtanh.pop %v421
    %v423 = vsub.f32 1.0, %v417
    %v424 = vmul.f32 %v423, %v422
    %v425 = vmul.f32 %v417, %v306
    %v426 = vadd.f32 %v424, %v425
    %vm427 = vcmp.gt.s32.totalorder %v305, 0
    %v428 = vsel %vm427, 1, 0
    %429 = vset.pattern.permute.xlu0 0
    %430 = vperm.xlu0 %429, %v428
    %v431 = vpop.permute.xlu0 %430
    %vm432 = vcmp.eq.s32.totalorder %v431, 1
    %v433 = vsel %vm432, %v426, 0.0
    %v435 = vrot.slane %v433, 1
    %437 = vst [vmem:[#allocation3] sm:$0x1] %v433
    %438 = vst [vmem:[#allocation3 + $0x8] sm:$0x1] %v435
    %v439 = vsel %vm432, %v426, %v306
    %s440 = scalar_lea.vmem [#allocation2], 6
    %v441 = vld [vmem:[%s440] sm:$0x3f]
    %442 = vmatpush.msra.mxu0 %v301
    %443 = vmatpush.msra.mxu0 %v298
    %444 = vmatpush.msra.mxu0 %v295
    %445 = vmatpush.msra.mxu0 %v292
    %446 = vmatpush.msra.mxu0 %v289
    %447 = vmatpush.msra.mxu0 %v286
    %448 = vmatpush.msra.mxu0 %v283
    %449 = vmatpush.msra.mxu0 %v280
    %450 = vmatpush.msra.mxu0 %v277
    %451 = vmatpush.msra.mxu0 %v274
    %452 = vmatpush.msra.mxu0 %v271
    %453 = vmatpush.msra.mxu0 %v268
    %454 = vmatpush.msra.mxu0 %v265
    %455 = vmatpush.msra.mxu0 %v262
    %456 = vmatpush.msra.mxu0 %v259
    %457 = vmatpush.msra.mxu0 %v256
    %458 = vmatmul.f32.gmra.mxu0 %v439
    %v459 = vpop.f32.mrf.mxu0
    %v460 = vadd.f32 %v309, %v459
    %461 = vdwg.mxu0
    %462 = vmatpush.msra.mxu0 %v302
    %463 = vmatpush.msra.mxu0 %v299
    %464 = vmatpush.msra.mxu0 %v296
    %465 = vmatpush.msra.mxu0 %v293
    %466 = vmatpush.msra.mxu0 %v290
    %467 = vmatpush.msra.mxu0 %v287
    %468 = vmatpush.msra.mxu0 %v284
    %469 = vmatpush.msra.mxu0 %v281
    %470 = vmatpush.msra.mxu0 %v278
    %471 = vmatpush.msra.mxu0 %v275
    %472 = vmatpush.msra.mxu0 %v272
    %473 = vmatpush.msra.mxu0 %v269
    %474 = vmatpush.msra.mxu0 %v266
    %475 = vmatpush.msra.mxu0 %v263
    %476 = vmatpush.msra.mxu0 %v260
    %477 = vmatpush.msra.mxu0 %v257
    %478 = vmatmul.f32.gmra.mxu0 %v439
    %v479 = vpop.f32.mrf.mxu0
    %v480 = vadd.f32 %v310, %v479
    %481 = vdwg.mxu0
    %482 = vmatpush.msra.mxu0 %v303
    %483 = vmatpush.msra.mxu0 %v300
    %484 = vmatpush.msra.mxu0 %v297
    %485 = vmatpush.msra.mxu0 %v294
    %486 = vmatpush.msra.mxu0 %v291
    %487 = vmatpush.msra.mxu0 %v288
    %488 = vmatpush.msra.mxu0 %v285
    %489 = vmatpush.msra.mxu0 %v282
    %490 = vmatpush.msra.mxu0 %v279
    %491 = vmatpush.msra.mxu0 %v276
    %492 = vmatpush.msra.mxu0 %v273
    %493 = vmatpush.msra.mxu0 %v270
    %494 = vmatpush.msra.mxu0 %v267
    %495 = vmatpush.msra.mxu0 %v264
    %496 = vmatpush.msra.mxu0 %v261
    %497 = vmatpush.msra.mxu0 %v258
    %498 = vmatmul.f32.gmra.mxu0 %v439
    %v499 = vpop.f32.mrf.mxu0
    %v500 = vadd.f32 %v311, %v499
    %501 = vdwg.mxu0
    %v502 = vadd.f32 %v441, %v460
    %v503 = vxor.u32 %v502, 2147483648
    %v504 = vmul.f32 %v503, 1.442695
    %v505 = vpow.pop %v504
    %v506 = vadd.f32 %v505, 1.0
    %v507 = vrcp.pop %v506
    %v508 = vmul.f32 %v506, %v507
    %v509 = vsub.f32 1.0, %v508
    %v510 = vmul.f32 %v507, %v509
    %v511 = vadd.f32 %v507, %v510
    %vm512 = vweird.f32 %v506
    %vm513 = vweird.f32 %v507
    %vm514 = vmor %vm512, %vm513
    %v515 = vsel %vm514, %v507, %v511
    %v516 = vand.u32 2147483647, %v506
    %vm517 = vcmp.eq.f32.partialorder %v516, 8.507059e+37
    %v518 = vand.u32 %v506, 2147483648
    %v519 = vor.u32 1.1754944e-38, %v518
    %v520 = vsel %vm517, %v519, %v515
    %v521 = vmul.f32 1.0, %v520
    %v523 = vrot.slane %v441, 2
    %v525 = vadd.f32 %v523, %v480
    %v526 = vxor.u32 %v525, 2147483648
    %v527 = vmul.f32 %v526, 1.442695
    %v528 = vpow.pop %v527
    %v529 = vadd.f32 %v528, 1.0
    %v530 = vrcp.pop %v529
    %v531 = vmul.f32 %v529, %v530
    %v532 = vsub.f32 1.0, %v531
    %v533 = vmul.f32 %v530, %v532
    %v534 = vadd.f32 %v530, %v533
    %vm535 = vweird.f32 %v529
    %vm536 = vweird.f32 %v530
    %vm537 = vmor %vm535, %vm536
    %v538 = vsel %vm537, %v530, %v534
    %v539 = vand.u32 2147483647, %v529
    %vm540 = vcmp.eq.f32.partialorder %v539, 8.507059e+37
    %v541 = vand.u32 %v529, 2147483648
    %v542 = vor.u32 1.1754944e-38, %v541
    %v543 = vsel %vm540, %v542, %v538
    %v544 = vmul.f32 1.0, %v543
    %v545 = vmul.f32 %v521, %v500
    %v546 = vrot.slane %v441, 4
    %v548 = vadd.f32 %v546, %v545
    %v549 = vtanh.pop %v548
    %v550 = vsub.f32 1.0, %v544
    %v551 = vmul.f32 %v550, %v549
    %v552 = vmul.f32 %v544, %v439
    %v553 = vadd.f32 %v551, %v552
    %vm554 = vcmp.gt.s32.totalorder %v305, 1
    %v555 = vsel %vm554, 1, 0
    %556 = vset.pattern.permute.xlu0 0
    %557 = vperm.xlu0 %556, %v555
    %v558 = vpop.permute.xlu0 %557
    %vm559 = vcmp.eq.s32.totalorder %v558, 1
    %v560 = vsel %vm559, %v553, 0.0
    %v562 = vrot.slane %v560, 1
    %564 = vst [vmem:[#allocation3 + $0x1] sm:$0x1] %v560
    %565 = vst [vmem:[#allocation3 + $0x9] sm:$0x1] %v562
    %v566 = vsel %vm559, %v553, %v439
    %s567 = scalar_lea.vmem [#allocation2], 12
    %v568 = vld [vmem:[%s567] sm:$0x3f]
    %569 = vmatpush.msra.mxu0 %v301
    %570 = vmatpush.msra.mxu0 %v298
    %571 = vmatpush.msra.mxu0 %v295
    %572 = vmatpush.msra.mxu0 %v292
    %573 = vmatpush.msra.mxu0 %v289
    %574 = vmatpush.msra.mxu0 %v286
    %575 = vmatpush.msra.mxu0 %v283
    %576 = vmatpush.msra.mxu0 %v280
    %577 = vmatpush.msra.mxu0 %v277
    %578 = vmatpush.msra.mxu0 %v274
    %579 = vmatpush.msra.mxu0 %v271
    %580 = vmatpush.msra.mxu0 %v268
    %581 = vmatpush.msra.mxu0 %v265
    %582 = vmatpush.msra.mxu0 %v262
    %583 = vmatpush.msra.mxu0 %v259
    %584 = vmatpush.msra.mxu0 %v256
    %585 = vmatmul.f32.gmra.mxu0 %v566
    %v586 = vpop.f32.mrf.mxu0
    %v587 = vadd.f32 %v309, %v586
    %588 = vdwg.mxu0
    %589 = vmatpush.msra.mxu0 %v302
    %590 = vmatpush.msra.mxu0 %v299
    %591 = vmatpush.msra.mxu0 %v296
    %592 = vmatpush.msra.mxu0 %v293
    %593 = vmatpush.msra.mxu0 %v290
    %594 = vmatpush.msra.mxu0 %v287
    %595 = vmatpush.msra.mxu0 %v284
    %596 = vmatpush.msra.mxu0 %v281
    %597 = vmatpush.msra.mxu0 %v278
    %598 = vmatpush.msra.mxu0 %v275
    %599 = vmatpush.msra.mxu0 %v272
    %600 = vmatpush.msra.mxu0 %v269
    %601 = vmatpush.msra.mxu0 %v266
    %602 = vmatpush.msra.mxu0 %v263
    %603 = vmatpush.msra.mxu0 %v260
    %604 = vmatpush.msra.mxu0 %v257
    %605 = vmatmul.f32.gmra.mxu0 %v566
    %v606 = vpop.f32.mrf.mxu0
    %v607 = vadd.f32 %v310, %v606
    %608 = vdwg.mxu0
    %609 = vmatpush.msra.mxu0 %v303
    %610 = vmatpush.msra.mxu0 %v300
    %611 = vmatpush.msra.mxu0 %v297
    %612 = vmatpush.msra.mxu0 %v294
    %613 = vmatpush.msra.mxu0 %v291
    %614 = vmatpush.msra.mxu0 %v288
    %615 = vmatpush.msra.mxu0 %v285
    %616 = vmatpush.msra.mxu0 %v282
    %617 = vmatpush.msra.mxu0 %v279
    %618 = vmatpush.msra.mxu0 %v276
    %619 = vmatpush.msra.mxu0 %v273
    %620 = vmatpush.msra.mxu0 %v270
    %621 = vmatpush.msra.mxu0 %v267
    %622 = vmatpush.msra.mxu0 %v264
    %623 = vmatpush.msra.mxu0 %v261
    %624 = vmatpush.msra.mxu0 %v258
    %625 = vmatmul.f32.gmra.mxu0 %v566
    %v626 = vpop.f32.mrf.mxu0
    %v627 = vadd.f32 %v311, %v626
    %628 = vdwg.mxu0
    %v629 = vadd.f32 %v568, %v587
    %v630 = vxor.u32 %v629, 2147483648
    %v631 = vmul.f32 %v630, 1.442695
    %v632 = vpow.pop %v631
    %v633 = vadd.f32 %v632, 1.0
    %v634 = vrcp.pop %v633
    %v635 = vmul.f32 %v633, %v634
    %v636 = vsub.f32 1.0, %v635
    %v637 = vmul.f32 %v634, %v636
    %v638 = vadd.f32 %v634, %v637
    %vm639 = vweird.f32 %v633
    %vm640 = vweird.f32 %v634
    %vm641 = vmor %vm639, %vm640
    %v642 = vsel %vm641, %v634, %v638
    %v643 = vand.u32 2147483647, %v633
    %vm644 = vcmp.eq.f32.partialorder %v643, 8.507059e+37
    %v645 = vand.u32 %v633, 2147483648
    %v646 = vor.u32 1.1754944e-38, %v645
    %v647 = vsel %vm644, %v646, %v642
    %v648 = vmul.f32 1.0, %v647
    %v650 = vrot.slane %v568, 2
    %v652 = vadd.f32 %v650, %v607
    %v653 = vxor.u32 %v652, 2147483648
    %v654 = vmul.f32 %v653, 1.442695
    %v655 = vpow.pop %v654
    %v656 = vadd.f32 %v655, 1.0
    %v657 = vrcp.pop %v656
    %v658 = vmul.f32 %v656, %v657
    %v659 = vsub.f32 1.0, %v658
    %v660 = vmul.f32 %v657, %v659
    %v661 = vadd.f32 %v657, %v660
    %vm662 = vweird.f32 %v656
    %vm663 = vweird.f32 %v657
    %vm664 = vmor %vm662, %vm663
    %v665 = vsel %vm664, %v657, %v661
    %v666 = vand.u32 2147483647, %v656
    %vm667 = vcmp.eq.f32.partialorder %v666, 8.507059e+37
    %v668 = vand.u32 %v656, 2147483648
    %v669 = vor.u32 1.1754944e-38, %v668
    %v670 = vsel %vm667, %v669, %v665
    %v671 = vmul.f32 1.0, %v670
    %v672 = vmul.f32 %v648, %v627
    %v673 = vrot.slane %v568, 4
    %v675 = vadd.f32 %v673, %v672
    %v676 = vtanh.pop %v675
    %v677 = vsub.f32 1.0, %v671
    %v678 = vmul.f32 %v677, %v676
    %v679 = vmul.f32 %v671, %v566
    %v680 = vadd.f32 %v678, %v679
    %vm681 = vcmp.gt.s32.totalorder %v305, 2
    %v682 = vsel %vm681, 1, 0
    %683 = vset.pattern.permute.xlu0 0
    %684 = vperm.xlu0 %683, %v682
    %v685 = vpop.permute.xlu0 %684
    %vm686 = vcmp.eq.s32.totalorder %v685, 1
    %v687 = vsel %vm686, %v680, 0.0
    %v689 = vrot.slane %v687, 1
    %691 = vst [vmem:[#allocation3 + $0x2] sm:$0x1] %v687
    %692 = vst [vmem:[#allocation3 + $0xa] sm:$0x1] %v689
    %v693 = vsel %vm686, %v680, %v566
    %s694 = scalar_lea.vmem [#allocation2], 18
    %v695 = vld [vmem:[%s694] sm:$0x3f]
    %696 = vmatpush.msra.mxu0 %v301
    %697 = vmatpush.msra.mxu0 %v298
    %698 = vmatpush.msra.mxu0 %v295
    %699 = vmatpush.msra.mxu0 %v292
    %700 = vmatpush.msra.mxu0 %v289
    %701 = vmatpush.msra.mxu0 %v286
    %702 = vmatpush.msra.mxu0 %v283
    %703 = vmatpush.msra.mxu0 %v280
    %704 = vmatpush.msra.mxu0 %v277
    %705 = vmatpush.msra.mxu0 %v274
    %706 = vmatpush.msra.mxu0 %v271
    %707 = vmatpush.msra.mxu0 %v268
    %708 = vmatpush.msra.mxu0 %v265
    %709 = vmatpush.msra.mxu0 %v262
    %710 = vmatpush.msra.mxu0 %v259
    %711 = vmatpush.msra.mxu0 %v256
    %712 = vmatmul.f32.gmra.mxu0 %v693
    %v713 = vpop.f32.mrf.mxu0
    %v714 = vadd.f32 %v309, %v713
    %715 = vdwg.mxu0
    %716 = vmatpush.msra.mxu0 %v302
    %717 = vmatpush.msra.mxu0 %v299
    %718 = vmatpush.msra.mxu0 %v296
    %719 = vmatpush.msra.mxu0 %v293
    %720 = vmatpush.msra.mxu0 %v290
    %721 = vmatpush.msra.mxu0 %v287
    %722 = vmatpush.msra.mxu0 %v284
    %723 = vmatpush.msra.mxu0 %v281
    %724 = vmatpush.msra.mxu0 %v278
    %725 = vmatpush.msra.mxu0 %v275
    %726 = vmatpush.msra.mxu0 %v272
    %727 = vmatpush.msra.mxu0 %v269
    %728 = vmatpush.msra.mxu0 %v266
    %729 = vmatpush.msra.mxu0 %v263
    %730 = vmatpush.msra.mxu0 %v260
    %731 = vmatpush.msra.mxu0 %v257
    %732 = vmatmul.f32.gmra.mxu0 %v693
    %v733 = vpop.f32.mrf.mxu0
    %v734 = vadd.f32 %v310, %v733
    %735 = vdwg.mxu0
    %736 = vmatpush.msra.mxu0 %v303
    %737 = vmatpush.msra.mxu0 %v300
    %738 = vmatpush.msra.mxu0 %v297
    %739 = vmatpush.msra.mxu0 %v294
    %740 = vmatpush.msra.mxu0 %v291
    %741 = vmatpush.msra.mxu0 %v288
    %742 = vmatpush.msra.mxu0 %v285
    %743 = vmatpush.msra.mxu0 %v282
    %744 = vmatpush.msra.mxu0 %v279
    %745 = vmatpush.msra.mxu0 %v276
    %746 = vmatpush.msra.mxu0 %v273
    %747 = vmatpush.msra.mxu0 %v270
    %748 = vmatpush.msra.mxu0 %v267
    %749 = vmatpush.msra.mxu0 %v264
    %750 = vmatpush.msra.mxu0 %v261
    %751 = vmatpush.msra.mxu0 %v258
    %752 = vmatmul.f32.gmra.mxu0 %v693
    %v753 = vpop.f32.mrf.mxu0
    %v754 = vadd.f32 %v311, %v753
    %755 = vdwg.mxu0
    %v756 = vadd.f32 %v695, %v714
    %v757 = vxor.u32 %v756, 2147483648
    %v758 = vmul.f32 %v757, 1.442695
    %v759 = vpow.pop %v758
    %v760 = vadd.f32 %v759, 1.0
    %v761 = vrcp.pop %v760
    %v762 = vmul.f32 %v760, %v761
    %v763 = vsub.f32 1.0, %v762
    %v764 = vmul.f32 %v761, %v763
    %v765 = vadd.f32 %v761, %v764
    %vm766 = vweird.f32 %v760
    %vm767 = vweird.f32 %v761
    %vm768 = vmor %vm766, %vm767
    %v769 = vsel %vm768, %v761, %v765
    %v770 = vand.u32 2147483647, %v760
    %vm771 = vcmp.eq.f32.partialorder %v770, 8.507059e+37
    %v772 = vand.u32 %v760, 2147483648
    %v773 = vor.u32 1.1754944e-38, %v772
    %v774 = vsel %vm771, %v773, %v769
    %v775 = vmul.f32 1.0, %v774
    %v777 = vrot.slane %v695, 2
    %v779 = vadd.f32 %v777, %v734
    %v780 = vxor.u32 %v779, 2147483648
    %v781 = vmul.f32 %v780, 1.442695
    %v782 = vpow.pop %v781
    %v783 = vadd.f32 %v782, 1.0
    %v784 = vrcp.pop %v783
    %v785 = vmul.f32 %v783, %v784
    %v786 = vsub.f32 1.0, %v785
    %v787 = vmul.f32 %v784, %v786
    %v788 = vadd.f32 %v784, %v787
    %vm789 = vweird.f32 %v783
    %vm790 = vweird.f32 %v784
    %vm791 = vmor %vm789, %vm790
    %v792 = vsel %vm791, %v784, %v788
    %v793 = vand.u32 2147483647, %v783
    %vm794 = vcmp.eq.f32.partialorder %v793, 8.507059e+37
    %v795 = vand.u32 %v783, 2147483648
    %v796 = vor.u32 1.1754944e-38, %v795
    %v797 = vsel %vm794, %v796, %v792
    %v798 = vmul.f32 1.0, %v797
    %v799 = vmul.f32 %v775, %v754
    %v800 = vrot.slane %v695, 4
    %v802 = vadd.f32 %v800, %v799
    %v803 = vtanh.pop %v802
    %v804 = vsub.f32 1.0, %v798
    %v805 = vmul.f32 %v804, %v803
    %v806 = vmul.f32 %v798, %v693
    %v807 = vadd.f32 %v805, %v806
    %vm808 = vcmp.gt.s32.totalorder %v305, 3
    %v809 = vsel %vm808, 1, 0
    %810 = vset.pattern.permute.xlu0 0
    %811 = vperm.xlu0 %810, %v809
    %v812 = vpop.permute.xlu0 %811
    %vm813 = vcmp.eq.s32.totalorder %v812, 1
    %v814 = vsel %vm813, %v807, 0.0
    %v816 = vrot.slane %v814, 1
    %818 = vst [vmem:[#allocation3 + $0x3] sm:$0x1] %v814
    %819 = vst [vmem:[#allocation3 + $0xb] sm:$0x1] %v816
    %v820 = vsel %vm813, %v807, %v693
    %s821 = scalar_lea.vmem [#allocation2], 24
    %v822 = vld [vmem:[%s821] sm:$0x3f]
    %823 = vmatpush.msra.mxu0 %v301
    %824 = vmatpush.msra.mxu0 %v298
    %825 = vmatpush.msra.mxu0 %v295
    %826 = vmatpush.msra.mxu0 %v292
    %827 = vmatpush.msra.mxu0 %v289
    %828 = vmatpush.msra.mxu0 %v286
    %829 = vmatpush.msra.mxu0 %v283
    %830 = vmatpush.msra.mxu0 %v280
    %831 = vmatpush.msra.mxu0 %v277
    %832 = vmatpush.msra.mxu0 %v274
    %833 = vmatpush.msra.mxu0 %v271
    %834 = vmatpush.msra.mxu0 %v268
    %835 = vmatpush.msra.mxu0 %v265
    %836 = vmatpush.msra.mxu0 %v262
    %837 = vmatpush.msra.mxu0 %v259
    %838 = vmatpush.msra.mxu0 %v256
    %839 = vmatmul.f32.gmra.mxu0 %v820
    %v840 = vpop.f32.mrf.mxu0
    %v841 = vadd.f32 %v309, %v840
    %842 = vdwg.mxu0
    %843 = vmatpush.msra.mxu0 %v302
    %844 = vmatpush.msra.mxu0 %v299
    %845 = vmatpush.msra.mxu0 %v296
    %846 = vmatpush.msra.mxu0 %v293
    %847 = vmatpush.msra.mxu0 %v290
    %848 = vmatpush.msra.mxu0 %v287
    %849 = vmatpush.msra.mxu0 %v284
    %850 = vmatpush.msra.mxu0 %v281
    %851 = vmatpush.msra.mxu0 %v278
    %852 = vmatpush.msra.mxu0 %v275
    %853 = vmatpush.msra.mxu0 %v272
    %854 = vmatpush.msra.mxu0 %v269
    %855 = vmatpush.msra.mxu0 %v266
    %856 = vmatpush.msra.mxu0 %v263
    %857 = vmatpush.msra.mxu0 %v260
    %858 = vmatpush.msra.mxu0 %v257
    %859 = vmatmul.f32.gmra.mxu0 %v820
    %v860 = vpop.f32.mrf.mxu0
    %v861 = vadd.f32 %v310, %v860
    %862 = vdwg.mxu0
    %863 = vmatpush.msra.mxu0 %v303
    %864 = vmatpush.msra.mxu0 %v300
    %865 = vmatpush.msra.mxu0 %v297
    %866 = vmatpush.msra.mxu0 %v294
    %867 = vmatpush.msra.mxu0 %v291
    %868 = vmatpush.msra.mxu0 %v288
    %869 = vmatpush.msra.mxu0 %v285
    %870 = vmatpush.msra.mxu0 %v282
    %871 = vmatpush.msra.mxu0 %v279
    %872 = vmatpush.msra.mxu0 %v276
    %873 = vmatpush.msra.mxu0 %v273
    %874 = vmatpush.msra.mxu0 %v270
    %875 = vmatpush.msra.mxu0 %v267
    %876 = vmatpush.msra.mxu0 %v264
    %877 = vmatpush.msra.mxu0 %v261
    %878 = vmatpush.msra.mxu0 %v258
    %879 = vmatmul.f32.gmra.mxu0 %v820
    %v880 = vpop.f32.mrf.mxu0
    %v881 = vadd.f32 %v311, %v880
    %882 = vdwg.mxu0
    %v883 = vadd.f32 %v822, %v841
    %v884 = vxor.u32 %v883, 2147483648
    %v885 = vmul.f32 %v884, 1.442695
    %v886 = vpow.pop %v885
    %v887 = vadd.f32 %v886, 1.0
    %v888 = vrcp.pop %v887
    %v889 = vmul.f32 %v887, %v888
    %v890 = vsub.f32 1.0, %v889
    %v891 = vmul.f32 %v888, %v890
    %v892 = vadd.f32 %v888, %v891
    %vm893 = vweird.f32 %v887
    %vm894 = vweird.f32 %v888
    %vm895 = vmor %vm893, %vm894
    %v896 = vsel %vm895, %v888, %v892
    %v897 = vand.u32 2147483647, %v887
    %vm898 = vcmp.eq.f32.partialorder %v897, 8.507059e+37
    %v899 = vand.u32 %v887, 2147483648
    %v900 = vor.u32 1.1754944e-38, %v899
    %v901 = vsel %vm898, %v900, %v896
    %v902 = vmul.f32 1.0, %v901
    %v904 = vrot.slane %v822, 2
    %v906 = vadd.f32 %v904, %v861
    %v907 = vxor.u32 %v906, 2147483648
    %v908 = vmul.f32 %v907, 1.442695
    %v909 = vpow.pop %v908
    %v910 = vadd.f32 %v909, 1.0
    %v911 = vrcp.pop %v910
    %v912 = vmul.f32 %v910, %v911
    %v913 = vsub.f32 1.0, %v912
    %v914 = vmul.f32 %v911, %v913
    %v915 = vadd.f32 %v911, %v914
    %vm916 = vweird.f32 %v910
    %vm917 = vweird.f32 %v911
    %vm918 = vmor %vm916, %vm917
    %v919 = vsel %vm918, %v911, %v915
    %v920 = vand.u32 2147483647, %v910
    %vm921 = vcmp.eq.f32.partialorder %v920, 8.507059e+37
    %v922 = vand.u32 %v910, 2147483648
    %v923 = vor.u32 1.1754944e-38, %v922
    %v924 = vsel %vm921, %v923, %v919
    %v925 = vmul.f32 1.0, %v924
    %v926 = vmul.f32 %v902, %v881
    %v927 = vrot.slane %v822, 4
    %v929 = vadd.f32 %v927, %v926
    %v930 = vtanh.pop %v929
    %v931 = vsub.f32 1.0, %v925
    %v932 = vmul.f32 %v931, %v930
    %v933 = vmul.f32 %v925, %v820
    %v934 = vadd.f32 %v932, %v933
    %vm935 = vcmp.gt.s32.totalorder %v305, 4
    %v936 = vsel %vm935, 1, 0
    %937 = vset.pattern.permute.xlu0 0
    %938 = vperm.xlu0 %937, %v936
    %v939 = vpop.permute.xlu0 %938
    %vm940 = vcmp.eq.s32.totalorder %v939, 1
    %v941 = vsel %vm940, %v934, 0.0
    %v943 = vrot.slane %v941, 1
    %945 = vst [vmem:[#allocation3 + $0x4] sm:$0x1] %v941
    %946 = vst [vmem:[#allocation3 + $0xc] sm:$0x1] %v943
    %v947 = vsel %vm940, %v934, %v820
    %s948 = scalar_lea.vmem [#allocation2], 30
    %v949 = vld [vmem:[%s948] sm:$0x3f]
    %950 = vmatpush.msra.mxu0 %v301
    %951 = vmatpush.msra.mxu0 %v298
    %952 = vmatpush.msra.mxu0 %v295
    %953 = vmatpush.msra.mxu0 %v292
    %954 = vmatpush.msra.mxu0 %v289
    %955 = vmatpush.msra.mxu0 %v286
    %956 = vmatpush.msra.mxu0 %v283
    %957 = vmatpush.msra.mxu0 %v280
    %958 = vmatpush.msra.mxu0 %v277
    %959 = vmatpush.msra.mxu0 %v274
    %960 = vmatpush.msra.mxu0 %v271
    %961 = vmatpush.msra.mxu0 %v268
    %962 = vmatpush.msra.mxu0 %v265
    %963 = vmatpush.msra.mxu0 %v262
    %964 = vmatpush.msra.mxu0 %v259
    %965 = vmatpush.msra.mxu0 %v256
    %966 = vmatmul.f32.gmra.mxu0 %v947
    %v967 = vpop.f32.mrf.mxu0
    %v968 = vadd.f32 %v309, %v967
    %969 = vdwg.mxu0
    %970 = vmatpush.msra.mxu0 %v302
    %971 = vmatpush.msra.mxu0 %v299
    %972 = vmatpush.msra.mxu0 %v296
    %973 = vmatpush.msra.mxu0 %v293
    %974 = vmatpush.msra.mxu0 %v290
    %975 = vmatpush.msra.mxu0 %v287
    %976 = vmatpush.msra.mxu0 %v284
    %977 = vmatpush.msra.mxu0 %v281
    %978 = vmatpush.msra.mxu0 %v278
    %979 = vmatpush.msra.mxu0 %v275
    %980 = vmatpush.msra.mxu0 %v272
    %981 = vmatpush.msra.mxu0 %v269
    %982 = vmatpush.msra.mxu0 %v266
    %983 = vmatpush.msra.mxu0 %v263
    %984 = vmatpush.msra.mxu0 %v260
    %985 = vmatpush.msra.mxu0 %v257
    %986 = vmatmul.f32.gmra.mxu0 %v947
    %v987 = vpop.f32.mrf.mxu0
    %v988 = vadd.f32 %v310, %v987
    %989 = vdwg.mxu0
    %990 = vmatpush.msra.mxu0 %v303
    %991 = vmatpush.msra.mxu0 %v300
    %992 = vmatpush.msra.mxu0 %v297
    %993 = vmatpush.msra.mxu0 %v294
    %994 = vmatpush.msra.mxu0 %v291
    %995 = vmatpush.msra.mxu0 %v288
    %996 = vmatpush.msra.mxu0 %v285
    %997 = vmatpush.msra.mxu0 %v282
    %998 = vmatpush.msra.mxu0 %v279
    %999 = vmatpush.msra.mxu0 %v276
    %1000 = vmatpush.msra.mxu0 %v273
    %1001 = vmatpush.msra.mxu0 %v270
    %1002 = vmatpush.msra.mxu0 %v267
    %1003 = vmatpush.msra.mxu0 %v264
    %1004 = vmatpush.msra.mxu0 %v261
    %1005 = vmatpush.msra.mxu0 %v258
    %1006 = vmatmul.f32.gmra.mxu0 %v947
    %v1007 = vpop.f32.mrf.mxu0
    %v1008 = vadd.f32 %v311, %v1007
    %1009 = vdwg.mxu0
    %v1010 = vadd.f32 %v949, %v968
    %v1011 = vxor.u32 %v1010, 2147483648
    %v1012 = vmul.f32 %v1011, 1.442695
    %v1013 = vpow.pop %v1012
    %v1014 = vadd.f32 %v1013, 1.0
    %v1015 = vrcp.pop %v1014
    %v1016 = vmul.f32 %v1014, %v1015
    %v1017 = vsub.f32 1.0, %v1016
    %v1018 = vmul.f32 %v1015, %v1017
    %v1019 = vadd.f32 %v1015, %v1018
    %vm1020 = vweird.f32 %v1014
    %vm1021 = vweird.f32 %v1015
    %vm1022 = vmor %vm1020, %vm1021
    %v1023 = vsel %vm1022, %v1015, %v1019
    %v1024 = vand.u32 2147483647, %v1014
    %vm1025 = vcmp.eq.f32.partialorder %v1024, 8.507059e+37
    %v1026 = vand.u32 %v1014, 2147483648
    %v1027 = vor.u32 1.1754944e-38, %v1026
    %v1028 = vsel %vm1025, %v1027, %v1023
    %v1029 = vmul.f32 1.0, %v1028
    %v1031 = vrot.slane %v949, 2
    %v1033 = vadd.f32 %v1031, %v988
    %v1034 = vxor.u32 %v1033, 2147483648
    %v1035 = vmul.f32 %v1034, 1.442695
    %v1036 = vpow.pop %v1035
    %v1037 = vadd.f32 %v1036, 1.0
    %v1038 = vrcp.pop %v1037
    %v1039 = vmul.f32 %v1037, %v1038
    %v1040 = vsub.f32 1.0, %v1039
    %v1041 = vmul.f32 %v1038, %v1040
    %v1042 = vadd.f32 %v1038, %v1041
    %vm1043 = vweird.f32 %v1037
    %vm1044 = vweird.f32 %v1038
    %vm1045 = vmor %vm1043, %vm1044
    %v1046 = vsel %vm1045, %v1038, %v1042
    %v1047 = vand.u32 2147483647, %v1037
    %vm1048 = vcmp.eq.f32.partialorder %v1047, 8.507059e+37
    %v1049 = vand.u32 %v1037, 2147483648
    %v1050 = vor.u32 1.1754944e-38, %v1049
    %v1051 = vsel %vm1048, %v1050, %v1046
    %v1052 = vmul.f32 1.0, %v1051
    %v1053 = vmul.f32 %v1029, %v1008
    %v1054 = vrot.slane %v949, 4
    %v1056 = vadd.f32 %v1054, %v1053
    %v1057 = vtanh.pop %v1056
    %v1058 = vsub.f32 1.0, %v1052
    %v1059 = vmul.f32 %v1058, %v1057
    %v1060 = vmul.f32 %v1052, %v947
    %v1061 = vadd.f32 %v1059, %v1060
    %vm1062 = vcmp.gt.s32.totalorder %v305, 5
    %v1063 = vsel %vm1062, 1, 0
    %1064 = vset.pattern.permute.xlu0 0
    %1065 = vperm.xlu0 %1064, %v1063
    %v1066 = vpop.permute.xlu0 %1065
    %vm1067 = vcmp.eq.s32.totalorder %v1066, 1
    %v1068 = vsel %vm1067, %v1061, 0.0
    %v1070 = vrot.slane %v1068, 1
    %1072 = vst [vmem:[#allocation3 + $0x5] sm:$0x1] %v1068
    %1073 = vst [vmem:[#allocation3 + $0xd] sm:$0x1] %v1070
    %v1074 = vsel %vm1067, %v1061, %v947
    %1075 = vst [vmem:[%s16] sm:$0x3] %v1074
    %v1076 = vld [vmem:[#allocation3] sm:$0x3f]
    %v1077 = vld [vmem:[#allocation3 + $0x8] sm:$0x3f]
    %v1078 = vld [vmem:[#allocation6] sm:$0xff]
    %v1079 = vld [vmem:[#allocation6 + $0x8] sm:$0xff]
    %v1080 = vld [vmem:[%s9] sm:$0xff]
    %v1081 = vld [vmem:[%s9 + $0x8] sm:$0xff]
    %v1082 = vld [vmem:[%s9 + $0x10] sm:$0xff]
    %v1083 = vld [vmem:[%s9 + $0x18] sm:$0xff]
    %vm1084 = vcmask 261120
    %v1086 = vsel %vm1084, %v1078, 0
    %v1089 = vsel %vm1084, %v1079, 0
    %1091 = vmatpush.msra.mxu0 0.0
    %1092 = vmatpush.msra.mxu0 0.0
    %1093 = vmatpush.msra.mxu0 0.0
    %1094 = vmatpush.msra.mxu0 0.0
    %1095 = vmatpush.msra.mxu0 0.0
    %1096 = vmatpush.msra.mxu0 0.0
    %1097 = vmatpush.msra.mxu0 0.0
    %1098 = vmatpush.msra.mxu0 0.0
    %1099 = vmatpush.msra.mxu0 0.0
    %1100 = vmatpush.msra.mxu0 0.0
    %1101 = vmatpush.msra.mxu0 0.0
    %1102 = vmatpush.msra.mxu0 0.0
    %1103 = vmatpush.msra.mxu0 %v1083
    %1104 = vmatpush.msra.mxu0 %v1082
    %1105 = vmatpush.msra.mxu0 %v1081
    %1106 = vmatpush.msra.mxu0 %v1080
    %1107 = vmatmul.f32.gmra.mxu0 %v1086
    %v1108 = vpop.f32.mrf.mxu0
    %v1109 = vadd.f32 0.0, %v1108
    %1110 = vmatmul.f32.gmra.mxu0 %v1089
    %v1111 = vpop.f32.mrf.mxu0
    %v1112 = vadd.f32 0.0, %v1111
    %1113 = vdwg.mxu0
    %1114 = vmatpush.xpose.msra.mxu0 0.0
    %1115 = vmatpush.xpose.msra.mxu0 0.0
    %1116 = vmatpush.xpose.msra.mxu0 0.0
    %1117 = vmatpush.xpose.msra.mxu0 0.0
    %1118 = vmatpush.xpose.msra.mxu0 0.0
    %1119 = vmatpush.xpose.msra.mxu0 0.0
    %1120 = vmatpush.xpose.msra.mxu0 0.0
    %1121 = vmatpush.xpose.msra.mxu0 0.0
    %1122 = vmatpush.xpose.msra.mxu0 0.0
    %1123 = vmatpush.xpose.msra.mxu0 0.0
    %1124 = vmatpush.xpose.msra.mxu0 0.0
    %1125 = vmatpush.xpose.msra.mxu0 0.0
    %1126 = vmatpush.xpose.msra.mxu0 0.0
    %1127 = vmatpush.xpose.msra.mxu0 0.0
    %1128 = vmatpush.xpose.msra.mxu0 0.0
    %1129 = vmatpush.xpose.msra.mxu0 %v1109
    %1130 = vmatmul.f32.gmra.mxu0 %v1076
    %v1131 = vpop.f32.mrf.mxu0
    %v1132 = vadd.f32 0.0, %v1131
    %1133 = vdwg.mxu0
    %1134 = vmatpush.xpose.msra.mxu0 0.0
    %1135 = vmatpush.xpose.msra.mxu0 0.0
    %1136 = vmatpush.xpose.msra.mxu0 0.0
    %1137 = vmatpush.xpose.msra.mxu0 0.0
    %1138 = vmatpush.xpose.msra.mxu0 0.0
    %1139 = vmatpush.xpose.msra.mxu0 0.0
    %1140 = vmatpush.xpose.msra.mxu0 0.0
    %1141 = vmatpush.xpose.msra.mxu0 0.0
    %1142 = vmatpush.xpose.msra.mxu0 0.0
    %1143 = vmatpush.xpose.msra.mxu0 0.0
    %1144 = vmatpush.xpose.msra.mxu0 0.0
    %1145 = vmatpush.xpose.msra.mxu0 0.0
    %1146 = vmatpush.xpose.msra.mxu0 0.0
    %1147 = vmatpush.xpose.msra.mxu0 0.0
    %1148 = vmatpush.xpose.msra.mxu0 0.0
    %1149 = vmatpush.xpose.msra.mxu0 %v1112
    %1150 = vmatmul.f32.gmra.mxu0 %v1077
    %v1151 = vpop.f32.mrf.mxu0
    %v1152 = vadd.f32 0.0, %v1151
    %1153 = vdwg.mxu0
    %v1154 = vlaneseq
    %v1155 = vshrl.u32 %v1154, 7
    %v1156 = vlaneseq
    %v1157 = vand.u32 %v1156, 127
    %v1158 = vrot.slane %v305, 1
    %v1159 = vperm.slane %v305, 0
    %v1160 = vperm.slane %v1158, 0
    %1161 = vset.pattern.permute.xlu0 0
    %1162 = vperm.xlu0 %1161, %v1159
    %v1163 = vpop.permute.xlu0 %1162
    %1164 = vset.pattern.permute.xlu0 0
    %1165 = vperm.xlu0 %1164, %v1160
    %v1166 = vpop.permute.xlu0 %1165
    %vm1167 = vcmp.lt.s32.totalorder %v1155, %v1163
    %vm1168 = vcmp.lt.s32.totalorder %v1155, %v1166
    %v1169 = vld [vmem:[%s0] sm:$0x3]
    %v1170 = vrot.slane %v1169, 1
    %v1171 = vperm.slane %v1169, 0
    %v1172 = vperm.slane %v1170, 0
    %1173 = vset.pattern.permute.xlu0 0
    %1174 = vperm.xlu0 %1173, %v1171
    %v1175 = vpop.permute.xlu0 %1174
    %1176 = vset.pattern.permute.xlu0 0
    %1177 = vperm.xlu0 %1176, %v1172
    %v1178 = vpop.permute.xlu0 %1177
    %vm1179 = vcmp.lt.s32.totalorder %v1157, %v1175
    %vm1180 = vcmp.lt.s32.totalorder %v1157, %v1178
    %vm1181 = vmand %vm1167, %vm1179
    %vm1182 = vmand %vm1168, %vm1180
    %v1183 = vsel %vm1181, %v1132, -1e-06
    %v1184 = vsel %vm1182, %v1152, -1e-06
    %vm1185 = vcmask 62464
    %v1186 = vsel %vm1185, %v1183, -inf
    %1187 = vmax.xlane.f32.xlu0 %v1186
    %v1188 = vpop.xlane.xlu0 %1187
    %v1189 = vsel %vm1185, %v1184, -inf
    %1190 = vmax.xlane.f32.xlu0 %v1189
    %v1191 = vpop.xlane.xlu0 %1190
    %v1192 = vsub.f32 %v1183, %v1188
    %v1193 = vsub.f32 %v1184, %v1191
    %v1194 = vmul.f32 %v1192, 1.442695
    %v1195 = vpow.pop %v1194
    %v1196 = vmul.f32 %v1193, 1.442695
    %v1197 = vpow.pop %v1196
    %v1198 = vsel %vm1185, %v1195, 0.0
    %1199 = vadd.xlane.f32.xlu0 %v1198
    %v1200 = vpop.xlane.xlu0 %1199
    %v1201 = vsel %vm1185, %v1197, 0.0
    %1202 = vadd.xlane.f32.xlu0 %v1201
    %v1203 = vpop.xlane.xlu0 %1202
    %v1204 = vrcp.pop %v1200
    %v1205 = vmul.f32 %v1200, %v1204
    %v1206 = vsub.f32 1.0, %v1205
    %v1207 = vmul.f32 %v1204, %v1206
    %v1208 = vadd.f32 %v1204, %v1207
    %vm1209 = vweird.f32 %v1200
    %vm1210 = vweird.f32 %v1204
    %vm1211 = vmor %vm1209, %vm1210
    %v1212 = vsel %vm1211, %v1204, %v1208
    %v1213 = vand.u32 2147483647, %v1200
    %vm1214 = vcmp.eq.f32.partialorder %v1213, 8.507059e+37
    %v1215 = vand.u32 %v1200, 2147483648
    %v1216 = vor.u32 1.1754944e-38, %v1215
    %v1217 = vsel %vm1214, %v1216, %v1212
    %v1218 = vmul.f32 %v1195, %v1217
    %v1219 = vrcp.pop %v1203
    %v1220 = vmul.f32 %v1203, %v1219
    %v1221 = vsub.f32 1.0, %v1220
    %v1222 = vmul.f32 %v1219, %v1221
    %v1223 = vadd.f32 %v1219, %v1222
    %vm1224 = vweird.f32 %v1203
    %vm1225 = vweird.f32 %v1219
    %vm1226 = vmor %vm1224, %vm1225
    %v1227 = vsel %vm1226, %v1219, %v1223
    %v1228 = vand.u32 2147483647, %v1203
    %vm1229 = vcmp.eq.f32.partialorder %v1228, 8.507059e+37
    %v1230 = vand.u32 %v1203, 2147483648
    %v1231 = vor.u32 1.1754944e-38, %v1230
    %v1232 = vsel %vm1229, %v1231, %v1227
    %v1233 = vmul.f32 %v1197, %v1232
    %vm1234 = vcmask 64512
    %v1236 = vsel %vm1234, %v1218, 0
    %1238 = vmatpush.msra.mxu0 0.0
    %1239 = vmatpush.msra.mxu0 0.0
    %1240 = vmatpush.msra.mxu0 0.0
    %1241 = vmatpush.msra.mxu0 0.0
    %1242 = vmatpush.msra.mxu0 0.0
    %1243 = vmatpush.msra.mxu0 0.0
    %1244 = vmatpush.msra.mxu0 0.0
    %1245 = vmatpush.msra.mxu0 0.0
    %1246 = vmatpush.msra.mxu0 0.0
    %1247 = vmatpush.msra.mxu0 0.0
    %1248 = vmatpush.msra.mxu0 0.0
    %1249 = vmatpush.msra.mxu0 0.0
    %1250 = vmatpush.msra.mxu0 0.0
    %1251 = vmatpush.msra.mxu0 0.0
    %1252 = vmatpush.msra.mxu0 0.0
    %1253 = vmatpush.msra.mxu0 %v1078
    %1254 = vmatmul.f32.gmra.mxu0 %v1236
    %v1255 = vpop.f32.mrf.mxu0
    %v1256 = vadd.f32 0.0, %v1255
    %1257 = vdwg.mxu0
    %v1259 = vsel %vm1234, %v1233, 0
    %1261 = vmatpush.msra.mxu0 0.0
    %1262 = vmatpush.msra.mxu0 0.0
    %1263 = vmatpush.msra.mxu0 0.0
    %1264 = vmatpush.msra.mxu0 0.0
    %1265 = vmatpush.msra.mxu0 0.0
    %1266 = vmatpush.msra.mxu0 0.0
    %1267 = vmatpush.msra.mxu0 0.0
    %1268 = vmatpush.msra.mxu0 0.0
    %1269 = vmatpush.msra.mxu0 0.0
    %1270 = vmatpush.msra.mxu0 0.0
    %1271 = vmatpush.msra.mxu0 0.0
    %1272 = vmatpush.msra.mxu0 0.0
    %1273 = vmatpush.msra.mxu0 0.0
    %1274 = vmatpush.msra.mxu0 0.0
    %1275 = vmatpush.msra.mxu0 0.0
    %1276 = vmatpush.msra.mxu0 %v1079
    %1277 = vmatmul.f32.gmra.mxu0 %v1259
    %v1278 = vpop.f32.mrf.mxu0
    %v1279 = vadd.f32 0.0, %v1278
    %1280 = vdwg.mxu0
    %v1283 = vrot.slane %v1256, 2
    %v1284 = vrot.slane %v1256, 4
    %v1285 = vrot.slane %v1279, 2
    %v1286 = vrot.slane %v1279, 4
    %v1287 = vld [vmem:[%s10] sm:$0xff]
    %v1288 = vld [vmem:[%s10 + $0x8] sm:$0xff]
    %v1289 = vld [vmem:[%s10 + $0x10] sm:$0xff]
    %v1290 = vld [vmem:[%s10 + $0x18] sm:$0xff]
    %v1293 = vrot.slane %v1076, 2
    %v1294 = vrot.slane %v1076, 4
    %v1295 = vrot.slane %v1077, 2
    %v1296 = vrot.slane %v1077, 4
    %v1297 = vld [vmem:[%s11] sm:$0xff]
    %v1298 = vld [vmem:[%s11 + $0x8] sm:$0xff]
    %v1299 = vld [vmem:[%s11 + $0x10] sm:$0xff]
    %v1300 = vld [vmem:[%s11 + $0x18] sm:$0xff]
    %v1301 = vld [vmem:[%s11 + $0x20] sm:$0xff]
    %v1302 = vld [vmem:[%s11 + $0x28] sm:$0xff]
    %v1303 = vld [vmem:[%s11 + $0x30] sm:$0xff]
    %v1304 = vld [vmem:[%s11 + $0x38] sm:$0xff]
    %v1305 = vld [vmem:[%s11 + $0x40] sm:$0xff]
    %v1306 = vld [vmem:[%s11 + $0x48] sm:$0xff]
    %v1307 = vld [vmem:[%s11 + $0x50] sm:$0xff]
    %v1308 = vld [vmem:[%s11 + $0x58] sm:$0xff]
    %v1309 = vld [vmem:[%s11 + $0x60] sm:$0xff]
    %v1310 = vld [vmem:[%s11 + $0x68] sm:$0xff]
    %v1311 = vld [vmem:[%s11 + $0x70] sm:$0xff]
    %v1312 = vld [vmem:[%s11 + $0x78] sm:$0xff]
    %1313 = vst [vmem:[#allocation1] ss:$4 sm:$0xff] %v1076
    %s1314 = scalar_lea.vmem [#allocation1], 1
    %1315 = vst [vmem:[%s1314] ss:$4 sm:$0xff] %v1293
    %s1316 = scalar_lea.vmem [#allocation1], 2
    %1317 = vst [vmem:[%s1316] ss:$4 sm:$0xff] %v1294
    %s1318 = scalar_lea.vmem [#allocation1], 3
    %1319 = vst [vmem:[%s1318] ss:$4 sm:$0xff] %v1077
    %s1320 = scalar_lea.vmem [#allocation1], 32
    %1321 = vst [vmem:[%s1320] ss:$4 sm:$0xff] %v1295
    %s1322 = scalar_lea.vmem [#allocation1], 33
    %1323 = vst [vmem:[%s1322] ss:$4 sm:$0xff] %v1296
    %v1324 = vld.sshfl [vmem:[#allocation1] sm:$0xff pattern:$0x73625140]
    %v1325 = vld.sshfl [vmem:[#allocation1 + $0x20] sm:$0xff pattern:$0x73625140]
    %1328 = vmatpush.msra.mxu0 %v1312
    %1329 = vmatpush.msra.mxu0 %v1311
    %1330 = vmatpush.msra.mxu0 %v1310
    %1331 = vmatpush.msra.mxu0 %v1309
    %1332 = vmatpush.msra.mxu0 %v1308
    %1333 = vmatpush.msra.mxu0 %v1307
    %1334 = vmatpush.msra.mxu0 %v1306
    %1335 = vmatpush.msra.mxu0 %v1305
    %1336 = vmatpush.msra.mxu0 %v1304
    %1337 = vmatpush.msra.mxu0 %v1303
    %1338 = vmatpush.msra.mxu0 %v1302
    %1339 = vmatpush.msra.mxu0 %v1301
    %1340 = vmatpush.msra.mxu0 %v1300
    %1341 = vmatpush.msra.mxu0 %v1299
    %1342 = vmatpush.msra.mxu0 %v1298
    %1343 = vmatpush.msra.mxu0 %v1297
    %1344 = vmatmul.f32.gmra.mxu0 %v1324
    %v1345 = vpop.f32.mrf.mxu0
    %v1346 = vadd.f32 0.0, %v1345
    %1347 = vmatmul.f32.gmra.mxu0 %v1325
    %v1348 = vpop.f32.mrf.mxu0
    %v1349 = vadd.f32 0.0, %v1348
    %1350 = vdwg.mxu0
    %1351 = vst [vmem:[#allocation1] ss:$4 sm:$0xff] %v1256
    %s1352 = scalar_lea.vmem [#allocation1], 1
    %1353 = vst [vmem:[%s1352] ss:$4 sm:$0xff] %v1283
    %s1354 = scalar_lea.vmem [#allocation1], 2
    %1355 = vst [vmem:[%s1354] ss:$4 sm:$0xff] %v1284
    %s1356 = scalar_lea.vmem [#allocation1], 3
    %1357 = vst [vmem:[%s1356] ss:$4 sm:$0xff] %v1279
    %s1358 = scalar_lea.vmem [#allocation1], 32
    %1359 = vst [vmem:[%s1358] ss:$4 sm:$0xff] %v1285
    %s1360 = scalar_lea.vmem [#allocation1], 33
    %1361 = vst [vmem:[%s1360] ss:$4 sm:$0xff] %v1286
    %v1362 = vld.sshfl [vmem:[#allocation1] sm:$0xff pattern:$0x73625140]
    %v1363 = vld.sshfl [vmem:[#allocation1 + $0x20] sm:$0xff pattern:$0x73625140]
    %v1364 = vsel %vm1084, %v1362, 0
    %v1366 = vsel %vm1084, %v1363, 0
    %1368 = vmatpush.msra.mxu0 0.0
    %1369 = vmatpush.msra.mxu0 0.0
    %1370 = vmatpush.msra.mxu0 0.0
    %1371 = vmatpush.msra.mxu0 0.0
    %1372 = vmatpush.msra.mxu0 0.0
    %1373 = vmatpush.msra.mxu0 0.0
    %1374 = vmatpush.msra.mxu0 0.0
    %1375 = vmatpush.msra.mxu0 0.0
    %1376 = vmatpush.msra.mxu0 0.0
    %1377 = vmatpush.msra.mxu0 0.0
    %1378 = vmatpush.msra.mxu0 0.0
    %1379 = vmatpush.msra.mxu0 0.0
    %1380 = vmatpush.msra.mxu0 %v1290
    %1381 = vmatpush.msra.mxu0 %v1289
    %1382 = vmatpush.msra.mxu0 %v1288
    %1383 = vmatpush.msra.mxu0 %v1287
    %1384 = vmatmul.f32.gmra.mxu0 %v1364
    %v1385 = vpop.f32.mrf.mxu0
    %v1386 = vadd.f32 %v1346, %v1385
    %1387 = vmatmul.f32.gmra.mxu0 %v1366
    %v1388 = vpop.f32.mrf.mxu0
    %v1389 = vadd.f32 %v1349, %v1388
    %1390 = vdwg.mxu0
    %v1391 = vld [vmem:[%s12] sm:$0x1]
    %v1393 = vperm.slane %v1391, 0
    %v1395 = vadd.f32 %v1386, %v1393
    %v1396 = vadd.f32 %v1389, %v1393
    %v1397 = vtanh.pop %v1395
    %v1398 = vtanh.pop %v1396
    %v1399 = vld [vmem:[#allocation8] sm:$0xff]
    %v1400 = vld [vmem:[#allocation8 + $0x8] sm:$0xff]
    %v1401 = vld [vmem:[#allocation8 + $0x10] sm:$0xff]
    %v1402 = vld [vmem:[#allocation8 + $0x18] sm:$0xff]
    %v1403 = vld [vmem:[#allocation8 + $0x20] sm:$0xff]
    %v1404 = vld [vmem:[#allocation8 + $0x28] sm:$0xff]
    %v1405 = vld [vmem:[#allocation8 + $0x30] sm:$0xff]
    %v1406 = vld [vmem:[#allocation8 + $0x38] sm:$0xff]
    %v1407 = vld [vmem:[#allocation8 + $0x40] sm:$0xff]
    %v1408 = vld [vmem:[#allocation8 + $0x48] sm:$0xff]
    %v1409 = vld [vmem:[#allocation8 + $0x50] sm:$0xff]
    %v1410 = vld [vmem:[#allocation8 + $0x58] sm:$0xff]
    %v1411 = vld [vmem:[#allocation8 + $0x60] sm:$0xff]
    %v1412 = vld [vmem:[#allocation8 + $0x68] sm:$0xff]
    %v1413 = vld [vmem:[#allocation8 + $0x70] sm:$0xff]
    %v1414 = vld [vmem:[#allocation8 + $0x78] sm:$0xff]
    %v1415 = vld [vmem:[%s14] sm:$0x1]
    %v1417 = vperm.slane %v1415, 0
    %1419 = vmatpush.msra.mxu0 %v1414
    %1420 = vmatpush.msra.mxu0 %v1413
    %1421 = vmatpush.msra.mxu0 %v1412
    %1422 = vmatpush.msra.mxu0 %v1411
    %1423 = vmatpush.msra.mxu0 %v1410
    %1424 = vmatpush.msra.mxu0 %v1409
    %1425 = vmatpush.msra.mxu0 %v1408
    %1426 = vmatpush.msra.mxu0 %v1407
    %1427 = vmatpush.msra.mxu0 %v1406
    %1428 = vmatpush.msra.mxu0 %v1405
    %1429 = vmatpush.msra.mxu0 %v1404
    %1430 = vmatpush.msra.mxu0 %v1403
    %1431 = vmatpush.msra.mxu0 %v1402
    %1432 = vmatpush.msra.mxu0 %v1401
    %1433 = vmatpush.msra.mxu0 %v1400
    %1434 = vmatpush.msra.mxu0 %v1399
    %1435 = vmatmul.f32.gmra.mxu0 %v1397
    %v1436 = vpop.f32.mrf.mxu0
    %v1437 = vadd.f32 %v1417, %v1436
    %1438 = vmatmul.f32.gmra.mxu0 %v1398
    %v1439 = vpop.f32.mrf.mxu0
    %v1440 = vadd.f32 %v1417, %v1439
    %1441 = vdwg.mxu0
    %1442 = vmax.xlane.f32.xlu0 %v1437
    %v1443 = vpop.xlane.xlu0 %1442
    %v1444 = vsel %vm224, %v1440, -inf
    %1445 = vmax.xlane.f32.xlu0 %v1444
    %v1446 = vpop.xlane.xlu0 %1445
    %v1447 = vsub.f32 %v1437, %v1443
    %v1448 = vsub.f32 %v1440, %v1446
    %v1449 = vmul.f32 %v1447, 1.442695
    %v1450 = vpow.pop %v1449
    %v1451 = vmul.f32 %v1448, 1.442695
    %v1452 = vpow.pop %v1451
    %1453 = vadd.xlane.f32.xlu0 %v1450
    %v1454 = vpop.xlane.xlu0 %1453
    %v1455 = vsel %vm224, %v1452, 0.0
    %1456 = vadd.xlane.f32.xlu0 %v1455
    %v1457 = vpop.xlane.xlu0 %1456
    %v1458 = vlog2.pop %v1454
    %v1459 = vmul.f32 %v1458, 0.6931472
    %v1460 = vlog2.pop %v1457
    %v1461 = vmul.f32 %v1460, 0.6931472
    %v1462 = vadd.f32 %v1459, %v1443
    %v1463 = vadd.f32 %v1461, %v1446
    %v1464 = vsub.f32 %v1437, %v1462
    %v1465 = vsub.f32 %v1440, %v1463
    %v1468 = vrot.slane %v1464, 2
    %v1469 = vrot.slane %v1464, 4
    %v1470 = vrot.slane %v1464, 6
    %v1471 = vrot.slane %v1465, 2
    %1472 = vst [vmem:[#allocation1] ss:$4 sm:$0xff] %v1464
    %s1473 = scalar_lea.vmem [#allocation1], 1
    %1474 = vst [vmem:[%s1473] ss:$4 sm:$0xff] %v1468
    %s1475 = scalar_lea.vmem [#allocation1], 2
    %1476 = vst [vmem:[%s1475] ss:$4 sm:$0xff] %v1469
    %v1477 = vld.sshfl [vmem:[#allocation1] sm:$0xff pattern:$0x73625140]
    %s1478 = scalar_lea.vmem [#allocation1], 32
    %1479 = vst [vmem:[%s1478] ss:$4 sm:$0xff] %v1470
    %s1480 = scalar_lea.vmem [#allocation1], 33
    %1481 = vst [vmem:[%s1480] ss:$4 sm:$0xff] %v1465
    %s1482 = scalar_lea.vmem [#allocation1], 34
    %1483 = vst [vmem:[%s1482] ss:$4 sm:$0xff] %v1471
    %v1484 = vld.sshfl [vmem:[#allocation1 + $0x20] sm:$0xff pattern:$0x73625140]
    %1487 = vst [vmem:[%s15] sm:$0x3f] %v1477
    %1488 = vst [vmem:[%s15 + $0x8] sm:$0x3f] %v1484
    // Predicated region
    $region74: #{decoder_forward.1} parent=1 // pred_check
      _
    $region75: #{decoder_forward.1} parent=1 // pred_check_branch
      %1490 = sbr.rel (0) target = $region77
    $region76: #{decoder_forward.1} parent=1 // pred_region
      _
    $region77: #{decoder_forward.1} parent=1 // pred_fallthru
      _
    // Predicated region
    $region78: #{decoder_forward.1} parent=1 // pred_check
      _
    $region79: #{decoder_forward.1} parent=1 // pred_check_branch
      %1492 = sbr.rel (0) target = $region81
    $region80: #{decoder_forward.1} parent=1 // pred_region
      _
    $region81: #{decoder_forward.1} parent=1 // pred_fallthru
      _
    // Predicated region
    $region82: #{decoder_forward.1} parent=1 // pred_check
      _
    $region83: #{decoder_forward.1} parent=1 // pred_check_branch
      %1494 = sbr.rel (0) target = $region85
    $region84: #{decoder_forward.1} parent=1 // pred_region
      _
    $region85: #{decoder_forward.1} parent=1 // pred_fallthru
      _
    // Predicated region
    $region86: #{decoder_forward.1} parent=1 // pred_check
      _
    $region87: #{decoder_forward.1} parent=1 // pred_check_branch
      %1496 = sbr.rel (0) target = $region89
    $region88: #{decoder_forward.1} parent=1 // pred_region
      _
    $region89: #{decoder_forward.1} parent=1 // pred_fallthru
      _
    %1497 = vsyncpa [#allocation5], 1
    %1498 = vsyncpa [#allocation7], 1

</llo_original>
